<compile_context>
chip_gen: v6e
topology: v6e:2x2x1
jax: 0.10.0
libtpu: 0.0.40
codegen_flags: <defaults>
</compile_context>

<pallas_src>
import functools

import jax
import jax.numpy as jnp
from jax import lax
from jax.experimental import pallas as pl
from jax.experimental.pallas import tpu as pltpu


def _conv3x3(xf, w_ref, col_ref, masks, shifts, C, HW):
    """3x3 'same' conv of a channel-major image as one lane-dense MXU matmul.

    xf     : (C, H*W)   activations (value), lane axis = flattened spatial
    w_ref  : (C, 9*C)   weights, columns ordered (kh, kw, cin)
    col_ref: (9*C, H*W) im2col scratch (VMEM), rows ordered tap-major
    masks  : 9 boolean (C, H*W) zero-padding masks (None = no mask)
    shifts : 9 flat-index offsets d = dh*W + dw for the taps
    """
    for t in range(9):
        d = shifts[t]
        rolled = xf if d == 0 else pltpu.roll(xf, (-d) % HW, axis=1)
        m = masks[t]
        slab = rolled if m is None else jnp.where(m, rolled, 0.0)
        col_ref[t * C:(t + 1) * C, :] = slab
    return jnp.dot(w_ref[...], col_ref[...], preferred_element_type=jnp.float32)


def srse_kernel(x_ref, w1_ref, alpha_ref, w2_ref,
                sw1_ref, sb1_ref, sw2_ref, sb2_ref,
                o_ref, col_ref, *, H, W):
    B, C, HW = x_ref.shape

    # --- zero-padding masks for the 9 taps (lane-index arithmetic only, once per step)
    p = lax.broadcasted_iota(jnp.int32, (C, HW), 1)          # flat pixel index
    top_ok = p >= W                                          # i >= 1
    bot_ok = p < (H - 1) * W                                 # i <= H-2
    if (W & (W - 1)) == 0:                                   # power-of-two W: cheap bit-and
        j = jnp.bitwise_and(p, W - 1)
    else:
        j = p % W                                            # TODO(synk): vector mod path
    left_ok = j >= 1                                         # j >= 1
    right_ok = j <= W - 2                                    # j <= W-2
    row_ok = {-1: top_ok, 0: None, 1: bot_ok}
    col_ok = {-1: left_ok, 0: None, 1: right_ok}

    masks, shifts = [], []
    for dh in (-1, 0, 1):
        for dw in (-1, 0, 1):
            mi, mj = row_ok[dh], col_ok[dw]
            if mi is None:
                m = mj
            elif mj is None:
                m = mi
            else:
                m = jnp.logical_and(mi, mj)
            masks.append(m)
            shifts.append(dh * W + dw)

    alpha = alpha_ref[0, 0]                                  # shared PReLU slope (SMEM scalar)

    for b in range(B):                                       # static unroll over blocked images
        xf = x_ref[b]                                        # (C, H*W), lane-dense

        # conv1 (3x3 same) + PReLU
        o1 = _conv3x3(xf, w1_ref, col_ref, masks, shifts, C, HW)
        o1 = jnp.where(o1 > 0, o1, alpha * o1)

        # conv2 (3x3 same)
        o2 = _conv3x3(o1, w2_ref, col_ref, masks, shifts, C, HW)

        # Squeeze-Excite on VPU/XLU/EUP (no M=1 MXU matmuls)
        y = jnp.mean(o2, axis=1, keepdims=True)                              # (C, 1)
        h = jnp.sum(y * sw1_ref[...], axis=0, keepdims=True) + sb1_ref[...]  # (1, Cr)
        h = jnp.maximum(h, 0.0)
        s = jnp.sum(sw2_ref[...] * h, axis=1, keepdims=True) + sb2_ref[...]  # (C, 1)
        s = jax.nn.sigmoid(s)

        # channel scale + residual add; lane-dense (C, H*W) store
        o_ref[b] = (o2 * s + xf).astype(o_ref.dtype)


def srse_block(x_nchw, w1_hwio, alpha, w2_hwio, sw1, sb1, sw2, sb2, *, block_b=None):
    """Forward pass of SrSEBlock. Input/output are NCHW (PyTorch convention)."""
    N, C, H, W = x_nchw.shape
    HW = H * W
    Cr = sw1.shape[1]

    if block_b is None:                       # amortize per-grid-step overhead
        block_b = next(bb for bb in (8, 4, 2, 1) if N % bb == 0)

    # Channel-major flat-spatial layout: both wrapper reshapes are free (contiguous).
    x_flat = x_nchw.reshape(N, C, HW).astype(jnp.float32)

    # Conv weights as (C_out, 9*C_in) slabs, columns ordered (kh, kw, cin) to match
    # the tap-major im2col rows built in-kernel.
    w1_2d = jnp.transpose(w1_hwio.astype(jnp.float32), (3, 0, 1, 2)).reshape(C, 9 * C)
    w2_2d = jnp.transpose(w2_hwio.astype(jnp.float32), (3, 0, 1, 2)).reshape(C, 9 * C)

    # SE params in channel-major-friendly shapes: fc2 weight transposed, fc2 bias as a column.
    sw1_f = sw1.astype(jnp.float32)                           # (C, Cr)
    sb1_f = sb1.astype(jnp.float32)                           # (1, Cr)
    sw2_cm = jnp.transpose(sw2.astype(jnp.float32))           # (C, Cr)
    sb2_col = sb2.astype(jnp.float32).reshape(C, 1)           # (C, 1)

    kernel = functools.partial(srse_kernel, H=H, W=W)

    out_flat = pl.pallas_call(
        kernel,
        out_shape=jax.ShapeDtypeStruct((N, C, HW), jnp.float32),
        grid_spec=pltpu.PrefetchScalarGridSpec(
            num_scalar_prefetch=0,
            grid=(N // block_b,),                            # block_b images per grid step
            in_specs=[
                pl.BlockSpec((block_b, C, HW), lambda n: (n, 0, 0)),   # x (channel-major flat)
                pl.BlockSpec((C, 9 * C), lambda n: (0, 0)),            # conv1 weight slab
                pl.BlockSpec(memory_space=pltpu.MemorySpace.SMEM),     # PReLU alpha (scalar)
                pl.BlockSpec((C, 9 * C), lambda n: (0, 0)),            # conv2 weight slab
                pl.BlockSpec((C, Cr), lambda n: (0, 0)),               # SE fc1 weight
                pl.BlockSpec((1, Cr), lambda n: (0, 0)),               # SE fc1 bias
                pl.BlockSpec((C, Cr), lambda n: (0, 0)),               # SE fc2 weight (transposed)
                pl.BlockSpec((C, 1), lambda n: (0, 0)),                # SE fc2 bias (column)
            ],
            out_specs=pl.BlockSpec((block_b, C, HW), lambda n: (n, 0, 0)),
            scratch_shapes=[
                pltpu.VMEM((9 * C, HW), jnp.float32),        # im2col slab, lane-dense
            ],
        ),
        compiler_params=pltpu.CompilerParams(
            dimension_semantics=("parallel",)),
    )(x_flat, w1_2d, alpha.astype(jnp.float32).reshape(1, 1), w2_2d,
      sw1_f, sb1_f, sw2_cm, sb2_col)

    return out_flat.reshape(N, C, H, W)


def ref_srse_block(x, w1, alpha, w2, sw1, sb1, sw2, sb2):
    """Pure-JAX reference (NCHW), mirrors the PyTorch forward."""
    conv = lambda v, w: jax.lax.conv_general_dilated(
        v, w, (1, 1), ((1, 1), (1, 1)),
        dimension_numbers=('NCHW', 'HWIO', 'NCHW'))
    a = alpha[0, 0]
    o = conv(x, w1)
    o = jnp.where(o > 0, o, a * o)                 # PReLU
    o = conv(o, w2)
    y = jnp.mean(o, axis=(2, 3))                   # global avg pool -> (N, C)
    h = jnp.maximum(y @ sw1 + sb1, 0.0)
    s = jax.nn.sigmoid(h @ sw2 + sb2)
    o = o * s[:, :, None, None]
    return o + x


if __name__ == "__main__":
    key = jax.random.PRNGKey(0)
    N, C, H, W = 2, 4, 16, 16
    reduction = 2                                  # SELayer reduction (C // r >= 1)
    Cr = C // reduction

    ks = jax.random.split(key, 7)
    x = jax.random.normal(ks[0], (N, C, H, W), jnp.float32)
    w1 = jax.random.normal(ks[1], (3, 3, C, C), jnp.float32) * 0.2   # HWIO
    w2 = jax.random.normal(ks[2], (3, 3, C, C), jnp.float32) * 0.2   # HWIO
    alpha = jnp.full((1, 1), 0.25, jnp.float32)                      # nn.PReLU() init
    sw1 = jax.random.normal(ks[3], (C, Cr), jnp.float32) * 0.5       # Linear(C, Cr).T
    sb1 = jax.random.normal(ks[4], (1, Cr), jnp.float32) * 0.1
    sw2 = jax.random.normal(ks[5], (Cr, C), jnp.float32) * 0.5       # Linear(Cr, C).T
    sb2 = jax.random.normal(ks[6], (1, C), jnp.float32) * 0.1

    out = srse_block(x, w1, alpha, w2, sw1, sb1, sw2, sb2)
    out = jax.block_until_ready(out)

    ref = ref_srse_block(x, w1, alpha, w2, sw1, sb1, sw2, sb2)
    assert out.shape == x.shape
    max_err = float(jnp.max(jnp.abs(out - ref)))
    assert jnp.allclose(out, ref, atol=1e-4, rtol=1e-4), max_err
    print("KERNEL_OK")
</pallas_src>

<mosaic_0001>
module attributes {stable_mosaic.version = 11 : i64} {
  func.func @srse_kernel(%arg0: i32, %arg1: memref<2x4x256xf32, #tpu.memory_space<vmem>>, %arg2: memref<4x36xf32, #tpu.memory_space<vmem>>, %arg3: memref<1x1xf32, #tpu.memory_space<smem>>, %arg4: memref<4x36xf32, #tpu.memory_space<vmem>>, %arg5: memref<4x2xf32, #tpu.memory_space<vmem>>, %arg6: memref<1x2xf32, #tpu.memory_space<vmem>>, %arg7: memref<4x2xf32, #tpu.memory_space<vmem>>, %arg8: memref<4x1xf32, #tpu.memory_space<vmem>>, %arg9: memref<2x4x256xf32, #tpu.memory_space<vmem>>, %arg10: memref<36x256xf32, #tpu.memory_space<vmem>>) attributes {dimension_semantics = [#tpu.dimension_semantics<parallel>], iteration_bounds = array<i64: 1>, scalar_prefetch = 0 : i64, scratch_operands = 1 : i64, tpu.core_type = #tpu.core_type<tc>, window_params = [{transform_indices = @transform_0, window_bounds = array<i64: 2, 4, 256>}, {pipeline_mode = #tpu.pipeline_mode<synchronous>, transform_indices = @transform_1, window_bounds = array<i64: 4, 36>}, {transform_indices = @transform_2, window_bounds = array<i64: 1, 1>}, {pipeline_mode = #tpu.pipeline_mode<synchronous>, transform_indices = @transform_3, window_bounds = array<i64: 4, 36>}, {pipeline_mode = #tpu.pipeline_mode<synchronous>, transform_indices = @transform_4, window_bounds = array<i64: 4, 2>}, {pipeline_mode = #tpu.pipeline_mode<synchronous>, transform_indices = @transform_5, window_bounds = array<i64: 1, 2>}, {pipeline_mode = #tpu.pipeline_mode<synchronous>, transform_indices = @transform_6, window_bounds = array<i64: 4, 2>}, {pipeline_mode = #tpu.pipeline_mode<synchronous>, transform_indices = @transform_7, window_bounds = array<i64: 4, 1>}, {transform_indices = @transform_8, window_bounds = array<i64: 2, 4, 256>}]} {
    %0 = tpu.iota {dimensions = array<i32: 1>} : vector<4x256xi32>
    %c16_i32 = arith.constant 16 : i32
    %1 = vector.broadcast %c16_i32 : i32 to vector<4x256xi32>
    %2 = arith.cmpi sge, %0, %1 : vector<4x256xi32>
    %c240_i32 = arith.constant 240 : i32
    %3 = vector.broadcast %c240_i32 : i32 to vector<4x256xi32>
    %4 = arith.cmpi slt, %0, %3 : vector<4x256xi32>
    %c15_i32 = arith.constant 15 : i32
    %5 = vector.broadcast %c15_i32 : i32 to vector<4x256xi32>
    %6 = arith.andi %0, %5 : vector<4x256xi32>
    %c1_i32 = arith.constant 1 : i32
    %7 = vector.broadcast %c1_i32 : i32 to vector<4x256xi32>
    %8 = arith.cmpi sge, %6, %7 : vector<4x256xi32>
    %c14_i32 = arith.constant 14 : i32
    %9 = vector.broadcast %c14_i32 : i32 to vector<4x256xi32>
    %10 = arith.cmpi sle, %6, %9 : vector<4x256xi32>
    %11 = arith.andi %2, %8 : vector<4x256xi1>
    %12 = arith.andi %2, %10 : vector<4x256xi1>
    %13 = arith.andi %4, %8 : vector<4x256xi1>
    %14 = arith.andi %4, %10 : vector<4x256xi1>
    %c0 = arith.constant 0 : index
    %c0_0 = arith.constant 0 : index
    %15 = memref.load %arg3[%c0, %c0_0] : memref<1x1xf32, #tpu.memory_space<smem>>
    %c0_1 = arith.constant 0 : index
    %c0_2 = arith.constant 0 : index
    %c0_3 = arith.constant 0 : index
    %16 = vector.load %arg1[%c0_1, %c0_2, %c0_3] : memref<2x4x256xf32, #tpu.memory_space<vmem>>, vector<1x4x256xf32>
    %17 = vector.shape_cast %16 : vector<1x4x256xf32> to vector<4x256xf32>
    %c17_i32 = arith.constant 17 : i32
    %18 = tpu.dynamic_rotate %17 by %c17_i32 dim 1 : vector<4x256xf32>, i32 -> vector<4x256xf32>
    %cst = arith.constant 0.000000e+00 : f32
    %19 = vector.broadcast %cst : f32 to vector<4x256xf32>
    %20 = arith.select %11, %18, %19 : vector<4x256xi1>, vector<4x256xf32>
    %c0_4 = arith.constant 0 : index
    %c0_5 = arith.constant 0 : index
    %21 = vector.load %arg10[%c0_4, %c0_5] : memref<36x256xf32, #tpu.memory_space<vmem>>, vector<4x256xf32>
    tpu.vector_store %arg10[%c0_4, %c0_5], %20 {strides = array<i32>} : memref<36x256xf32, #tpu.memory_space<vmem>>, vector<4x256xf32>,
    %c16_i32_6 = arith.constant 16 : i32
    %22 = tpu.dynamic_rotate %17 by %c16_i32_6 dim 1 : vector<4x256xf32>, i32 -> vector<4x256xf32>
    %cst_7 = arith.constant 0.000000e+00 : f32
    %23 = vector.broadcast %cst_7 : f32 to vector<4x256xf32>
    %24 = arith.select %2, %22, %23 : vector<4x256xi1>, vector<4x256xf32>
    %c4 = arith.constant 4 : index
    %c0_8 = arith.constant 0 : index
    %25 = vector.load %arg10[%c4, %c0_8] : memref<36x256xf32, #tpu.memory_space<vmem>>, vector<4x256xf32>
    tpu.vector_store %arg10[%c4, %c0_8], %24 {strides = array<i32>} : memref<36x256xf32, #tpu.memory_space<vmem>>, vector<4x256xf32>,
    %c15_i32_9 = arith.constant 15 : i32
    %26 = tpu.dynamic_rotate %17 by %c15_i32_9 dim 1 : vector<4x256xf32>, i32 -> vector<4x256xf32>
    %cst_10 = arith.constant 0.000000e+00 : f32
    %27 = vector.broadcast %cst_10 : f32 to vector<4x256xf32>
    %28 = arith.select %12, %26, %27 : vector<4x256xi1>, vector<4x256xf32>
    %c8 = arith.constant 8 : index
    %c0_11 = arith.constant 0 : index
    %29 = vector.load %arg10[%c8, %c0_11] : memref<36x256xf32, #tpu.memory_space<vmem>>, vector<4x256xf32>
    tpu.vector_store %arg10[%c8, %c0_11], %28 {strides = array<i32>} : memref<36x256xf32, #tpu.memory_space<vmem>>, vector<4x256xf32>,
    %c1_i32_12 = arith.constant 1 : i32
    %30 = tpu.dynamic_rotate %17 by %c1_i32_12 dim 1 : vector<4x256xf32>, i32 -> vector<4x256xf32>
    %cst_13 = arith.constant 0.000000e+00 : f32
    %31 = vector.broadcast %cst_13 : f32 to vector<4x256xf32>
    %32 = arith.select %8, %30, %31 : vector<4x256xi1>, vector<4x256xf32>
    %c12 = arith.constant 12 : index
    %c0_14 = arith.constant 0 : index
    %33 = vector.load %arg10[%c12, %c0_14] : memref<36x256xf32, #tpu.memory_space<vmem>>, vector<4x256xf32>
    tpu.vector_store %arg10[%c12, %c0_14], %32 {strides = array<i32>} : memref<36x256xf32, #tpu.memory_space<vmem>>, vector<4x256xf32>,
    %c16 = arith.constant 16 : index
    %c0_15 = arith.constant 0 : index
    %34 = vector.load %arg10[%c16, %c0_15] : memref<36x256xf32, #tpu.memory_space<vmem>>, vector<4x256xf32>
    tpu.vector_store %arg10[%c16, %c0_15], %17 {strides = array<i32>} : memref<36x256xf32, #tpu.memory_space<vmem>>, vector<4x256xf32>,
    %c255_i32 = arith.constant 255 : i32
    %35 = tpu.dynamic_rotate %17 by %c255_i32 dim 1 : vector<4x256xf32>, i32 -> vector<4x256xf32>
    %cst_16 = arith.constant 0.000000e+00 : f32
    %36 = vector.broadcast %cst_16 : f32 to vector<4x256xf32>
    %37 = arith.select %10, %35, %36 : vector<4x256xi1>, vector<4x256xf32>
    %c20 = arith.constant 20 : index
    %c0_17 = arith.constant 0 : index
    %38 = vector.load %arg10[%c20, %c0_17] : memref<36x256xf32, #tpu.memory_space<vmem>>, vector<4x256xf32>
    tpu.vector_store %arg10[%c20, %c0_17], %37 {strides = array<i32>} : memref<36x256xf32, #tpu.memory_space<vmem>>, vector<4x256xf32>,
    %c241_i32 = arith.constant 241 : i32
    %39 = tpu.dynamic_rotate %17 by %c241_i32 dim 1 : vector<4x256xf32>, i32 -> vector<4x256xf32>
    %cst_18 = arith.constant 0.000000e+00 : f32
    %40 = vector.broadcast %cst_18 : f32 to vector<4x256xf32>
    %41 = arith.select %13, %39, %40 : vector<4x256xi1>, vector<4x256xf32>
    %c24 = arith.constant 24 : index
    %c0_19 = arith.constant 0 : index
    %42 = vector.load %arg10[%c24, %c0_19] : memref<36x256xf32, #tpu.memory_space<vmem>>, vector<4x256xf32>
    tpu.vector_store %arg10[%c24, %c0_19], %41 {strides = array<i32>} : memref<36x256xf32, #tpu.memory_space<vmem>>, vector<4x256xf32>,
    %c240_i32_20 = arith.constant 240 : i32
    %43 = tpu.dynamic_rotate %17 by %c240_i32_20 dim 1 : vector<4x256xf32>, i32 -> vector<4x256xf32>
    %cst_21 = arith.constant 0.000000e+00 : f32
    %44 = vector.broadcast %cst_21 : f32 to vector<4x256xf32>
    %45 = arith.select %4, %43, %44 : vector<4x256xi1>, vector<4x256xf32>
    %c28 = arith.constant 28 : index
    %c0_22 = arith.constant 0 : index
    %46 = vector.load %arg10[%c28, %c0_22] : memref<36x256xf32, #tpu.memory_space<vmem>>, vector<4x256xf32>
    tpu.vector_store %arg10[%c28, %c0_22], %45 {strides = array<i32>} : memref<36x256xf32, #tpu.memory_space<vmem>>, vector<4x256xf32>,
    %c239_i32 = arith.constant 239 : i32
    %47 = tpu.dynamic_rotate %17 by %c239_i32 dim 1 : vector<4x256xf32>, i32 -> vector<4x256xf32>
    %cst_23 = arith.constant 0.000000e+00 : f32
    %48 = vector.broadcast %cst_23 : f32 to vector<4x256xf32>
    %49 = arith.select %14, %47, %48 : vector<4x256xi1>, vector<4x256xf32>
    %c32 = arith.constant 32 : index
    %c0_24 = arith.constant 0 : index
    %50 = vector.load %arg10[%c32, %c0_24] : memref<36x256xf32, #tpu.memory_space<vmem>>, vector<4x256xf32>
    tpu.vector_store %arg10[%c32, %c0_24], %49 {strides = array<i32>} : memref<36x256xf32, #tpu.memory_space<vmem>>, vector<4x256xf32>,
    %c0_25 = arith.constant 0 : index
    %c0_26 = arith.constant 0 : index
    %51 = vector.load %arg2[%c0_25, %c0_26] : memref<4x36xf32, #tpu.memory_space<vmem>>, vector<4x36xf32>
    %c0_27 = arith.constant 0 : index
    %c0_28 = arith.constant 0 : index
    %52 = vector.load %arg10[%c0_27, %c0_28] : memref<36x256xf32, #tpu.memory_space<vmem>>, vector<36x256xf32>
    %cst_29 = arith.constant dense<0.000000e+00> : vector<4x256xf32>
    %53 = tpu.matmul %51, %52, %cst_29 {dimension_numbers = #tpu.dot_dimension_numbers<[1], [0], [0], [1], [0, 0, 1, 1], [], []>} : vector<4x36xf32>, vector<36x256xf32>, vector<4x256xf32> -> vector<4x256xf32>
    %cst_30 = arith.constant 0.000000e+00 : f32
    %54 = vector.broadcast %cst_30 : f32 to vector<4x256xf32>
    %55 = arith.cmpf ogt, %53, %54 : vector<4x256xf32>
    %56 = vector.broadcast %15 : f32 to vector<4x256xf32>
    %57 = arith.mulf %56, %53 : vector<4x256xf32>
    %58 = arith.select %55, %53, %57 : vector<4x256xi1>, vector<4x256xf32>
    %c17_i32_31 = arith.constant 17 : i32
    %59 = tpu.dynamic_rotate %58 by %c17_i32_31 dim 1 : vector<4x256xf32>, i32 -> vector<4x256xf32>
    %cst_32 = arith.constant 0.000000e+00 : f32
    %60 = vector.broadcast %cst_32 : f32 to vector<4x256xf32>
    %61 = arith.select %11, %59, %60 : vector<4x256xi1>, vector<4x256xf32>
    %c0_33 = arith.constant 0 : index
    %c0_34 = arith.constant 0 : index
    %62 = vector.load %arg10[%c0_33, %c0_34] : memref<36x256xf32, #tpu.memory_space<vmem>>, vector<4x256xf32>
    tpu.vector_store %arg10[%c0_33, %c0_34], %61 {strides = array<i32>} : memref<36x256xf32, #tpu.memory_space<vmem>>, vector<4x256xf32>,
    %c16_i32_35 = arith.constant 16 : i32
    %63 = tpu.dynamic_rotate %58 by %c16_i32_35 dim 1 : vector<4x256xf32>, i32 -> vector<4x256xf32>
    %cst_36 = arith.constant 0.000000e+00 : f32
    %64 = vector.broadcast %cst_36 : f32 to vector<4x256xf32>
    %65 = arith.select %2, %63, %64 : vector<4x256xi1>, vector<4x256xf32>
    %c4_37 = arith.constant 4 : index
    %c0_38 = arith.constant 0 : index
    %66 = vector.load %arg10[%c4_37, %c0_38] : memref<36x256xf32, #tpu.memory_space<vmem>>, vector<4x256xf32>
    tpu.vector_store %arg10[%c4_37, %c0_38], %65 {strides = array<i32>} : memref<36x256xf32, #tpu.memory_space<vmem>>, vector<4x256xf32>,
    %c15_i32_39 = arith.constant 15 : i32
    %67 = tpu.dynamic_rotate %58 by %c15_i32_39 dim 1 : vector<4x256xf32>, i32 -> vector<4x256xf32>
    %cst_40 = arith.constant 0.000000e+00 : f32
    %68 = vector.broadcast %cst_40 : f32 to vector<4x256xf32>
    %69 = arith.select %12, %67, %68 : vector<4x256xi1>, vector<4x256xf32>
    %c8_41 = arith.constant 8 : index
    %c0_42 = arith.constant 0 : index
    %70 = vector.load %arg10[%c8_41, %c0_42] : memref<36x256xf32, #tpu.memory_space<vmem>>, vector<4x256xf32>
    tpu.vector_store %arg10[%c8_41, %c0_42], %69 {strides = array<i32>} : memref<36x256xf32, #tpu.memory_space<vmem>>, vector<4x256xf32>,
    %c1_i32_43 = arith.constant 1 : i32
    %71 = tpu.dynamic_rotate %58 by %c1_i32_43 dim 1 : vector<4x256xf32>, i32 -> vector<4x256xf32>
    %cst_44 = arith.constant 0.000000e+00 : f32
    %72 = vector.broadcast %cst_44 : f32 to vector<4x256xf32>
    %73 = arith.select %8, %71, %72 : vector<4x256xi1>, vector<4x256xf32>
    %c12_45 = arith.constant 12 : index
    %c0_46 = arith.constant 0 : index
    %74 = vector.load %arg10[%c12_45, %c0_46] : memref<36x256xf32, #tpu.memory_space<vmem>>, vector<4x256xf32>
    tpu.vector_store %arg10[%c12_45, %c0_46], %73 {strides = array<i32>} : memref<36x256xf32, #tpu.memory_space<vmem>>, vector<4x256xf32>,
    %c16_47 = arith.constant 16 : index
    %c0_48 = arith.constant 0 : index
    %75 = vector.load %arg10[%c16_47, %c0_48] : memref<36x256xf32, #tpu.memory_space<vmem>>, vector<4x256xf32>
    tpu.vector_store %arg10[%c16_47, %c0_48], %58 {strides = array<i32>} : memref<36x256xf32, #tpu.memory_space<vmem>>, vector<4x256xf32>,
    %c255_i32_49 = arith.constant 255 : i32
    %76 = tpu.dynamic_rotate %58 by %c255_i32_49 dim 1 : vector<4x256xf32>, i32 -> vector<4x256xf32>
    %cst_50 = arith.constant 0.000000e+00 : f32
    %77 = vector.broadcast %cst_50 : f32 to vector<4x256xf32>
    %78 = arith.select %10, %76, %77 : vector<4x256xi1>, vector<4x256xf32>
    %c20_51 = arith.constant 20 : index
    %c0_52 = arith.constant 0 : index
    %79 = vector.load %arg10[%c20_51, %c0_52] : memref<36x256xf32, #tpu.memory_space<vmem>>, vector<4x256xf32>
    tpu.vector_store %arg10[%c20_51, %c0_52], %78 {strides = array<i32>} : memref<36x256xf32, #tpu.memory_space<vmem>>, vector<4x256xf32>,
    %c241_i32_53 = arith.constant 241 : i32
    %80 = tpu.dynamic_rotate %58 by %c241_i32_53 dim 1 : vector<4x256xf32>, i32 -> vector<4x256xf32>
    %cst_54 = arith.constant 0.000000e+00 : f32
    %81 = vector.broadcast %cst_54 : f32 to vector<4x256xf32>
    %82 = arith.select %13, %80, %81 : vector<4x256xi1>, vector<4x256xf32>
    %c24_55 = arith.constant 24 : index
    %c0_56 = arith.constant 0 : index
    %83 = vector.load %arg10[%c24_55, %c0_56] : memref<36x256xf32, #tpu.memory_space<vmem>>, vector<4x256xf32>
    tpu.vector_store %arg10[%c24_55, %c0_56], %82 {strides = array<i32>} : memref<36x256xf32, #tpu.memory_space<vmem>>, vector<4x256xf32>,
    %c240_i32_57 = arith.constant 240 : i32
    %84 = tpu.dynamic_rotate %58 by %c240_i32_57 dim 1 : vector<4x256xf32>, i32 -> vector<4x256xf32>
    %cst_58 = arith.constant 0.000000e+00 : f32
    %85 = vector.broadcast %cst_58 : f32 to vector<4x256xf32>
    %86 = arith.select %4, %84, %85 : vector<4x256xi1>, vector<4x256xf32>
    %c28_59 = arith.constant 28 : index
    %c0_60 = arith.constant 0 : index
    %87 = vector.load %arg10[%c28_59, %c0_60] : memref<36x256xf32, #tpu.memory_space<vmem>>, vector<4x256xf32>
    tpu.vector_store %arg10[%c28_59, %c0_60], %86 {strides = array<i32>} : memref<36x256xf32, #tpu.memory_space<vmem>>, vector<4x256xf32>,
    %c239_i32_61 = arith.constant 239 : i32
    %88 = tpu.dynamic_rotate %58 by %c239_i32_61 dim 1 : vector<4x256xf32>, i32 -> vector<4x256xf32>
    %cst_62 = arith.constant 0.000000e+00 : f32
    %89 = vector.broadcast %cst_62 : f32 to vector<4x256xf32>
    %90 = arith.select %14, %88, %89 : vector<4x256xi1>, vector<4x256xf32>
    %c32_63 = arith.constant 32 : index
    %c0_64 = arith.constant 0 : index
    %91 = vector.load %arg10[%c32_63, %c0_64] : memref<36x256xf32, #tpu.memory_space<vmem>>, vector<4x256xf32>
    tpu.vector_store %arg10[%c32_63, %c0_64], %90 {strides = array<i32>} : memref<36x256xf32, #tpu.memory_space<vmem>>, vector<4x256xf32>,
    %c0_65 = arith.constant 0 : index
    %c0_66 = arith.constant 0 : index
    %92 = vector.load %arg4[%c0_65, %c0_66] : memref<4x36xf32, #tpu.memory_space<vmem>>, vector<4x36xf32>
    %c0_67 = arith.constant 0 : index
    %c0_68 = arith.constant 0 : index
    %93 = vector.load %arg10[%c0_67, %c0_68] : memref<36x256xf32, #tpu.memory_space<vmem>>, vector<36x256xf32>
    %cst_69 = arith.constant dense<0.000000e+00> : vector<4x256xf32>
    %94 = tpu.matmul %92, %93, %cst_69 {dimension_numbers = #tpu.dot_dimension_numbers<[1], [0], [0], [1], [0, 0, 1, 1], [], []>} : vector<4x36xf32>, vector<36x256xf32>, vector<4x256xf32> -> vector<4x256xf32>
    %cst_70 = arith.constant dense<0.000000e+00> : vector<4xf32>
    %95 = vector.multi_reduction <add>, %94, %cst_70 [1] : vector<4x256xf32> to vector<4xf32>
    %96 = vector.shape_cast %95 : vector<4xf32> to vector<4x1xf32>
    %cst_71 = arith.constant 2.560000e+02 : f32
    %97 = vector.broadcast %cst_71 : f32 to vector<4x1xf32>
    %98 = arith.divf %96, %97 : vector<4x1xf32>
    %c0_72 = arith.constant 0 : index
    %c0_73 = arith.constant 0 : index
    %99 = vector.load %arg5[%c0_72, %c0_73] : memref<4x2xf32, #tpu.memory_space<vmem>>, vector<4x2xf32>
    %100 = vector.broadcast %98 : vector<4x1xf32> to vector<4x2xf32>
    %101 = arith.mulf %100, %99 : vector<4x2xf32>
    %cst_74 = arith.constant dense<0.000000e+00> : vector<2xf32>
    %102 = vector.multi_reduction <add>, %101, %cst_74 [0] : vector<4x2xf32> to vector<2xf32>
    %103 = vector.shape_cast %102 : vector<2xf32> to vector<1x2xf32>
    %c0_75 = arith.constant 0 : index
    %c0_76 = arith.constant 0 : index
    %104 = vector.load %arg6[%c0_75, %c0_76] : memref<1x2xf32, #tpu.memory_space<vmem>>, vector<1x2xf32>
    %105 = arith.addf %103, %104 : vector<1x2xf32>
    %cst_77 = arith.constant 0.000000e+00 : f32
    %106 = vector.broadcast %cst_77 : f32 to vector<1x2xf32>
    %107 = arith.maximumf %105, %106 : vector<1x2xf32>
    %c0_78 = arith.constant 0 : index
    %c0_79 = arith.constant 0 : index
    %108 = vector.load %arg7[%c0_78, %c0_79] : memref<4x2xf32, #tpu.memory_space<vmem>>, vector<4x2xf32>
    %109 = vector.broadcast %107 : vector<1x2xf32> to vector<4x2xf32>
    %110 = arith.mulf %108, %109 : vector<4x2xf32>
    %cst_80 = arith.constant dense<0.000000e+00> : vector<4xf32>
    %111 = vector.multi_reduction <add>, %110, %cst_80 [1] : vector<4x2xf32> to vector<4xf32>
    %112 = vector.shape_cast %111 : vector<4xf32> to vector<4x1xf32>
    %c0_81 = arith.constant 0 : index
    %c0_82 = arith.constant 0 : index
    %113 = vector.load %arg8[%c0_81, %c0_82] : memref<4x1xf32, #tpu.memory_space<vmem>>, vector<4x1xf32>
    %114 = arith.addf %112, %113 : vector<4x1xf32>
    %115 = arith.negf %114 : vector<4x1xf32>
    %116 = math.exp %115 : vector<4x1xf32>
    %cst_83 = arith.constant 1.000000e+00 : f32
    %117 = vector.broadcast %cst_83 : f32 to vector<4x1xf32>
    %118 = arith.addf %117, %116 : vector<4x1xf32>
    %119 = arith.divf %117, %118 : vector<4x1xf32>
    %120 = vector.broadcast %119 : vector<4x1xf32> to vector<4x256xf32>
    %121 = arith.mulf %94, %120 : vector<4x256xf32>
    %122 = arith.addf %121, %17 : vector<4x256xf32>
    %c0_84 = arith.constant 0 : index
    %c0_85 = arith.constant 0 : index
    %c0_86 = arith.constant 0 : index
    %123 = vector.load %arg9[%c0_84, %c0_85, %c0_86] : memref<2x4x256xf32, #tpu.memory_space<vmem>>, vector<1x4x256xf32>
    %124 = vector.shape_cast %123 : vector<1x4x256xf32> to vector<4x256xf32>
    %125 = vector.shape_cast %122 : vector<4x256xf32> to vector<1x4x256xf32>
    tpu.vector_store %arg9[%c0_84, %c0_85, %c0_86], %125 {strides = array<i32>} : memref<2x4x256xf32, #tpu.memory_space<vmem>>, vector<1x4x256xf32>,
    %c1 = arith.constant 1 : index
    %c0_87 = arith.constant 0 : index
    %c0_88 = arith.constant 0 : index
    %126 = vector.load %arg1[%c1, %c0_87, %c0_88] : memref<2x4x256xf32, #tpu.memory_space<vmem>>, vector<1x4x256xf32>
    %127 = vector.shape_cast %126 : vector<1x4x256xf32> to vector<4x256xf32>
    %c17_i32_89 = arith.constant 17 : i32
    %128 = tpu.dynamic_rotate %127 by %c17_i32_89 dim 1 : vector<4x256xf32>, i32 -> vector<4x256xf32>
    %cst_90 = arith.constant 0.000000e+00 : f32
    %129 = vector.broadcast %cst_90 : f32 to vector<4x256xf32>
    %130 = arith.select %11, %128, %129 : vector<4x256xi1>, vector<4x256xf32>
    %c0_91 = arith.constant 0 : index
    %c0_92 = arith.constant 0 : index
    %131 = vector.load %arg10[%c0_91, %c0_92] : memref<36x256xf32, #tpu.memory_space<vmem>>, vector<4x256xf32>
    tpu.vector_store %arg10[%c0_91, %c0_92], %130 {strides = array<i32>} : memref<36x256xf32, #tpu.memory_space<vmem>>, vector<4x256xf32>,
    %c16_i32_93 = arith.constant 16 : i32
    %132 = tpu.dynamic_rotate %127 by %c16_i32_93 dim 1 : vector<4x256xf32>, i32 -> vector<4x256xf32>
    %cst_94 = arith.constant 0.000000e+00 : f32
    %133 = vector.broadcast %cst_94 : f32 to vector<4x256xf32>
    %134 = arith.select %2, %132, %133 : vector<4x256xi1>, vector<4x256xf32>
    %c4_95 = arith.constant 4 : index
    %c0_96 = arith.constant 0 : index
    %135 = vector.load %arg10[%c4_95, %c0_96] : memref<36x256xf32, #tpu.memory_space<vmem>>, vector<4x256xf32>
    tpu.vector_store %arg10[%c4_95, %c0_96], %134 {strides = array<i32>} : memref<36x256xf32, #tpu.memory_space<vmem>>, vector<4x256xf32>,
    %c15_i32_97 = arith.constant 15 : i32
    %136 = tpu.dynamic_rotate %127 by %c15_i32_97 dim 1 : vector<4x256xf32>, i32 -> vector<4x256xf32>
    %cst_98 = arith.constant 0.000000e+00 : f32
    %137 = vector.broadcast %cst_98 : f32 to vector<4x256xf32>
    %138 = arith.select %12, %136, %137 : vector<4x256xi1>, vector<4x256xf32>
    %c8_99 = arith.constant 8 : index
    %c0_100 = arith.constant 0 : index
    %139 = vector.load %arg10[%c8_99, %c0_100] : memref<36x256xf32, #tpu.memory_space<vmem>>, vector<4x256xf32>
    tpu.vector_store %arg10[%c8_99, %c0_100], %138 {strides = array<i32>} : memref<36x256xf32, #tpu.memory_space<vmem>>, vector<4x256xf32>,
    %c1_i32_101 = arith.constant 1 : i32
    %140 = tpu.dynamic_rotate %127 by %c1_i32_101 dim 1 : vector<4x256xf32>, i32 -> vector<4x256xf32>
    %cst_102 = arith.constant 0.000000e+00 : f32
    %141 = vector.broadcast %cst_102 : f32 to vector<4x256xf32>
    %142 = arith.select %8, %140, %141 : vector<4x256xi1>, vector<4x256xf32>
    %c12_103 = arith.constant 12 : index
    %c0_104 = arith.constant 0 : index
    %143 = vector.load %arg10[%c12_103, %c0_104] : memref<36x256xf32, #tpu.memory_space<vmem>>, vector<4x256xf32>
    tpu.vector_store %arg10[%c12_103, %c0_104], %142 {strides = array<i32>} : memref<36x256xf32, #tpu.memory_space<vmem>>, vector<4x256xf32>,
    %c16_105 = arith.constant 16 : index
    %c0_106 = arith.constant 0 : index
    %144 = vector.load %arg10[%c16_105, %c0_106] : memref<36x256xf32, #tpu.memory_space<vmem>>, vector<4x256xf32>
    tpu.vector_store %arg10[%c16_105, %c0_106], %127 {strides = array<i32>} : memref<36x256xf32, #tpu.memory_space<vmem>>, vector<4x256xf32>,
    %c255_i32_107 = arith.constant 255 : i32
    %145 = tpu.dynamic_rotate %127 by %c255_i32_107 dim 1 : vector<4x256xf32>, i32 -> vector<4x256xf32>
    %cst_108 = arith.constant 0.000000e+00 : f32
    %146 = vector.broadcast %cst_108 : f32 to vector<4x256xf32>
    %147 = arith.select %10, %145, %146 : vector<4x256xi1>, vector<4x256xf32>
    %c20_109 = arith.constant 20 : index
    %c0_110 = arith.constant 0 : index
    %148 = vector.load %arg10[%c20_109, %c0_110] : memref<36x256xf32, #tpu.memory_space<vmem>>, vector<4x256xf32>
    tpu.vector_store %arg10[%c20_109, %c0_110], %147 {strides = array<i32>} : memref<36x256xf32, #tpu.memory_space<vmem>>, vector<4x256xf32>,
    %c241_i32_111 = arith.constant 241 : i32
    %149 = tpu.dynamic_rotate %127 by %c241_i32_111 dim 1 : vector<4x256xf32>, i32 -> vector<4x256xf32>
    %cst_112 = arith.constant 0.000000e+00 : f32
    %150 = vector.broadcast %cst_112 : f32 to vector<4x256xf32>
    %151 = arith.select %13, %149, %150 : vector<4x256xi1>, vector<4x256xf32>
    %c24_113 = arith.constant 24 : index
    %c0_114 = arith.constant 0 : index
    %152 = vector.load %arg10[%c24_113, %c0_114] : memref<36x256xf32, #tpu.memory_space<vmem>>, vector<4x256xf32>
    tpu.vector_store %arg10[%c24_113, %c0_114], %151 {strides = array<i32>} : memref<36x256xf32, #tpu.memory_space<vmem>>, vector<4x256xf32>,
    %c240_i32_115 = arith.constant 240 : i32
    %153 = tpu.dynamic_rotate %127 by %c240_i32_115 dim 1 : vector<4x256xf32>, i32 -> vector<4x256xf32>
    %cst_116 = arith.constant 0.000000e+00 : f32
    %154 = vector.broadcast %cst_116 : f32 to vector<4x256xf32>
    %155 = arith.select %4, %153, %154 : vector<4x256xi1>, vector<4x256xf32>
    %c28_117 = arith.constant 28 : index
    %c0_118 = arith.constant 0 : index
    %156 = vector.load %arg10[%c28_117, %c0_118] : memref<36x256xf32, #tpu.memory_space<vmem>>, vector<4x256xf32>
    tpu.vector_store %arg10[%c28_117, %c0_118], %155 {strides = array<i32>} : memref<36x256xf32, #tpu.memory_space<vmem>>, vector<4x256xf32>,
    %c239_i32_119 = arith.constant 239 : i32
    %157 = tpu.dynamic_rotate %127 by %c239_i32_119 dim 1 : vector<4x256xf32>, i32 -> vector<4x256xf32>
    %cst_120 = arith.constant 0.000000e+00 : f32
    %158 = vector.broadcast %cst_120 : f32 to vector<4x256xf32>
    %159 = arith.select %14, %157, %158 : vector<4x256xi1>, vector<4x256xf32>
    %c32_121 = arith.constant 32 : index
    %c0_122 = arith.constant 0 : index
    %160 = vector.load %arg10[%c32_121, %c0_122] : memref<36x256xf32, #tpu.memory_space<vmem>>, vector<4x256xf32>
    tpu.vector_store %arg10[%c32_121, %c0_122], %159 {strides = array<i32>} : memref<36x256xf32, #tpu.memory_space<vmem>>, vector<4x256xf32>,
    %c0_123 = arith.constant 0 : index
    %c0_124 = arith.constant 0 : index
    %161 = vector.load %arg2[%c0_123, %c0_124] : memref<4x36xf32, #tpu.memory_space<vmem>>, vector<4x36xf32>
    %c0_125 = arith.constant 0 : index
    %c0_126 = arith.constant 0 : index
    %162 = vector.load %arg10[%c0_125, %c0_126] : memref<36x256xf32, #tpu.memory_space<vmem>>, vector<36x256xf32>
    %cst_127 = arith.constant dense<0.000000e+00> : vector<4x256xf32>
    %163 = tpu.matmul %161, %162, %cst_127 {dimension_numbers = #tpu.dot_dimension_numbers<[1], [0], [0], [1], [0, 0, 1, 1], [], []>} : vector<4x36xf32>, vector<36x256xf32>, vector<4x256xf32> -> vector<4x256xf32>
    %cst_128 = arith.constant 0.000000e+00 : f32
    %164 = vector.broadcast %cst_128 : f32 to vector<4x256xf32>
    %165 = arith.cmpf ogt, %163, %164 : vector<4x256xf32>
    %166 = vector.broadcast %15 : f32 to vector<4x256xf32>
    %167 = arith.mulf %166, %163 : vector<4x256xf32>
    %168 = arith.select %165, %163, %167 : vector<4x256xi1>, vector<4x256xf32>
    %c17_i32_129 = arith.constant 17 : i32
    %169 = tpu.dynamic_rotate %168 by %c17_i32_129 dim 1 : vector<4x256xf32>, i32 -> vector<4x256xf32>
    %cst_130 = arith.constant 0.000000e+00 : f32
    %170 = vector.broadcast %cst_130 : f32 to vector<4x256xf32>
    %171 = arith.select %11, %169, %170 : vector<4x256xi1>, vector<4x256xf32>
    %c0_131 = arith.constant 0 : index
    %c0_132 = arith.constant 0 : index
    %172 = vector.load %arg10[%c0_131, %c0_132] : memref<36x256xf32, #tpu.memory_space<vmem>>, vector<4x256xf32>
    tpu.vector_store %arg10[%c0_131, %c0_132], %171 {strides = array<i32>} : memref<36x256xf32, #tpu.memory_space<vmem>>, vector<4x256xf32>,
    %c16_i32_133 = arith.constant 16 : i32
    %173 = tpu.dynamic_rotate %168 by %c16_i32_133 dim 1 : vector<4x256xf32>, i32 -> vector<4x256xf32>
    %cst_134 = arith.constant 0.000000e+00 : f32
    %174 = vector.broadcast %cst_134 : f32 to vector<4x256xf32>
    %175 = arith.select %2, %173, %174 : vector<4x256xi1>, vector<4x256xf32>
    %c4_135 = arith.constant 4 : index
    %c0_136 = arith.constant 0 : index
    %176 = vector.load %arg10[%c4_135, %c0_136] : memref<36x256xf32, #tpu.memory_space<vmem>>, vector<4x256xf32>
    tpu.vector_store %arg10[%c4_135, %c0_136], %175 {strides = array<i32>} : memref<36x256xf32, #tpu.memory_space<vmem>>, vector<4x256xf32>,
    %c15_i32_137 = arith.constant 15 : i32
    %177 = tpu.dynamic_rotate %168 by %c15_i32_137 dim 1 : vector<4x256xf32>, i32 -> vector<4x256xf32>
    %cst_138 = arith.constant 0.000000e+00 : f32
    %178 = vector.broadcast %cst_138 : f32 to vector<4x256xf32>
    %179 = arith.select %12, %177, %178 : vector<4x256xi1>, vector<4x256xf32>
    %c8_139 = arith.constant 8 : index
    %c0_140 = arith.constant 0 : index
    %180 = vector.load %arg10[%c8_139, %c0_140] : memref<36x256xf32, #tpu.memory_space<vmem>>, vector<4x256xf32>
    tpu.vector_store %arg10[%c8_139, %c0_140], %179 {strides = array<i32>} : memref<36x256xf32, #tpu.memory_space<vmem>>, vector<4x256xf32>,
    %c1_i32_141 = arith.constant 1 : i32
    %181 = tpu.dynamic_rotate %168 by %c1_i32_141 dim 1 : vector<4x256xf32>, i32 -> vector<4x256xf32>
    %cst_142 = arith.constant 0.000000e+00 : f32
    %182 = vector.broadcast %cst_142 : f32 to vector<4x256xf32>
    %183 = arith.select %8, %181, %182 : vector<4x256xi1>, vector<4x256xf32>
    %c12_143 = arith.constant 12 : index
    %c0_144 = arith.constant 0 : index
    %184 = vector.load %arg10[%c12_143, %c0_144] : memref<36x256xf32, #tpu.memory_space<vmem>>, vector<4x256xf32>
    tpu.vector_store %arg10[%c12_143, %c0_144], %183 {strides = array<i32>} : memref<36x256xf32, #tpu.memory_space<vmem>>, vector<4x256xf32>,
    %c16_145 = arith.constant 16 : index
    %c0_146 = arith.constant 0 : index
    %185 = vector.load %arg10[%c16_145, %c0_146] : memref<36x256xf32, #tpu.memory_space<vmem>>, vector<4x256xf32>
    tpu.vector_store %arg10[%c16_145, %c0_146], %168 {strides = array<i32>} : memref<36x256xf32, #tpu.memory_space<vmem>>, vector<4x256xf32>,
    %c255_i32_147 = arith.constant 255 : i32
    %186 = tpu.dynamic_rotate %168 by %c255_i32_147 dim 1 : vector<4x256xf32>, i32 -> vector<4x256xf32>
    %cst_148 = arith.constant 0.000000e+00 : f32
    %187 = vector.broadcast %cst_148 : f32 to vector<4x256xf32>
    %188 = arith.select %10, %186, %187 : vector<4x256xi1>, vector<4x256xf32>
    %c20_149 = arith.constant 20 : index
    %c0_150 = arith.constant 0 : index
    %189 = vector.load %arg10[%c20_149, %c0_150] : memref<36x256xf32, #tpu.memory_space<vmem>>, vector<4x256xf32>
    tpu.vector_store %arg10[%c20_149, %c0_150], %188 {strides = array<i32>} : memref<36x256xf32, #tpu.memory_space<vmem>>, vector<4x256xf32>,
    %c241_i32_151 = arith.constant 241 : i32
    %190 = tpu.dynamic_rotate %168 by %c241_i32_151 dim 1 : vector<4x256xf32>, i32 -> vector<4x256xf32>
    %cst_152 = arith.constant 0.000000e+00 : f32
    %191 = vector.broadcast %cst_152 : f32 to vector<4x256xf32>
    %192 = arith.select %13, %190, %191 : vector<4x256xi1>, vector<4x256xf32>
    %c24_153 = arith.constant 24 : index
    %c0_154 = arith.constant 0 : index
    %193 = vector.load %arg10[%c24_153, %c0_154] : memref<36x256xf32, #tpu.memory_space<vmem>>, vector<4x256xf32>
    tpu.vector_store %arg10[%c24_153, %c0_154], %192 {strides = array<i32>} : memref<36x256xf32, #tpu.memory_space<vmem>>, vector<4x256xf32>,
    %c240_i32_155 = arith.constant 240 : i32
    %194 = tpu.dynamic_rotate %168 by %c240_i32_155 dim 1 : vector<4x256xf32>, i32 -> vector<4x256xf32>
    %cst_156 = arith.constant 0.000000e+00 : f32
    %195 = vector.broadcast %cst_156 : f32 to vector<4x256xf32>
    %196 = arith.select %4, %194, %195 : vector<4x256xi1>, vector<4x256xf32>
    %c28_157 = arith.constant 28 : index
    %c0_158 = arith.constant 0 : index
    %197 = vector.load %arg10[%c28_157, %c0_158] : memref<36x256xf32, #tpu.memory_space<vmem>>, vector<4x256xf32>
    tpu.vector_store %arg10[%c28_157, %c0_158], %196 {strides = array<i32>} : memref<36x256xf32, #tpu.memory_space<vmem>>, vector<4x256xf32>,
    %c239_i32_159 = arith.constant 239 : i32
    %198 = tpu.dynamic_rotate %168 by %c239_i32_159 dim 1 : vector<4x256xf32>, i32 -> vector<4x256xf32>
    %cst_160 = arith.constant 0.000000e+00 : f32
    %199 = vector.broadcast %cst_160 : f32 to vector<4x256xf32>
    %200 = arith.select %14, %198, %199 : vector<4x256xi1>, vector<4x256xf32>
    %c32_161 = arith.constant 32 : index
    %c0_162 = arith.constant 0 : index
    %201 = vector.load %arg10[%c32_161, %c0_162] : memref<36x256xf32, #tpu.memory_space<vmem>>, vector<4x256xf32>
    tpu.vector_store %arg10[%c32_161, %c0_162], %200 {strides = array<i32>} : memref<36x256xf32, #tpu.memory_space<vmem>>, vector<4x256xf32>,
    %c0_163 = arith.constant 0 : index
    %c0_164 = arith.constant 0 : index
    %202 = vector.load %arg4[%c0_163, %c0_164] : memref<4x36xf32, #tpu.memory_space<vmem>>, vector<4x36xf32>
    %c0_165 = arith.constant 0 : index
    %c0_166 = arith.constant 0 : index
    %203 = vector.load %arg10[%c0_165, %c0_166] : memref<36x256xf32, #tpu.memory_space<vmem>>, vector<36x256xf32>
    %cst_167 = arith.constant dense<0.000000e+00> : vector<4x256xf32>
    %204 = tpu.matmul %202, %203, %cst_167 {dimension_numbers = #tpu.dot_dimension_numbers<[1], [0], [0], [1], [0, 0, 1, 1], [], []>} : vector<4x36xf32>, vector<36x256xf32>, vector<4x256xf32> -> vector<4x256xf32>
    %cst_168 = arith.constant dense<0.000000e+00> : vector<4xf32>
    %205 = vector.multi_reduction <add>, %204, %cst_168 [1] : vector<4x256xf32> to vector<4xf32>
    %206 = vector.shape_cast %205 : vector<4xf32> to vector<4x1xf32>
    %cst_169 = arith.constant 2.560000e+02 : f32
    %207 = vector.broadcast %cst_169 : f32 to vector<4x1xf32>
    %208 = arith.divf %206, %207 : vector<4x1xf32>
    %c0_170 = arith.constant 0 : index
    %c0_171 = arith.constant 0 : index
    %209 = vector.load %arg5[%c0_170, %c0_171] : memref<4x2xf32, #tpu.memory_space<vmem>>, vector<4x2xf32>
    %210 = vector.broadcast %208 : vector<4x1xf32> to vector<4x2xf32>
    %211 = arith.mulf %210, %209 : vector<4x2xf32>
    %cst_172 = arith.constant dense<0.000000e+00> : vector<2xf32>
    %212 = vector.multi_reduction <add>, %211, %cst_172 [0] : vector<4x2xf32> to vector<2xf32>
    %213 = vector.shape_cast %212 : vector<2xf32> to vector<1x2xf32>
    %c0_173 = arith.constant 0 : index
    %c0_174 = arith.constant 0 : index
    %214 = vector.load %arg6[%c0_173, %c0_174] : memref<1x2xf32, #tpu.memory_space<vmem>>, vector<1x2xf32>
    %215 = arith.addf %213, %214 : vector<1x2xf32>
    %cst_175 = arith.constant 0.000000e+00 : f32
    %216 = vector.broadcast %cst_175 : f32 to vector<1x2xf32>
    %217 = arith.maximumf %215, %216 : vector<1x2xf32>
    %c0_176 = arith.constant 0 : index
    %c0_177 = arith.constant 0 : index
    %218 = vector.load %arg7[%c0_176, %c0_177] : memref<4x2xf32, #tpu.memory_space<vmem>>, vector<4x2xf32>
    %219 = vector.broadcast %217 : vector<1x2xf32> to vector<4x2xf32>
    %220 = arith.mulf %218, %219 : vector<4x2xf32>
    %cst_178 = arith.constant dense<0.000000e+00> : vector<4xf32>
    %221 = vector.multi_reduction <add>, %220, %cst_178 [1] : vector<4x2xf32> to vector<4xf32>
    %222 = vector.shape_cast %221 : vector<4xf32> to vector<4x1xf32>
    %c0_179 = arith.constant 0 : index
    %c0_180 = arith.constant 0 : index
    %223 = vector.load %arg8[%c0_179, %c0_180] : memref<4x1xf32, #tpu.memory_space<vmem>>, vector<4x1xf32>
    %224 = arith.addf %222, %223 : vector<4x1xf32>
    %225 = arith.negf %224 : vector<4x1xf32>
    %226 = math.exp %225 : vector<4x1xf32>
    %cst_181 = arith.constant 1.000000e+00 : f32
    %227 = vector.broadcast %cst_181 : f32 to vector<4x1xf32>
    %228 = arith.addf %227, %226 : vector<4x1xf32>
    %229 = arith.divf %227, %228 : vector<4x1xf32>
    %230 = vector.broadcast %229 : vector<4x1xf32> to vector<4x256xf32>
    %231 = arith.mulf %204, %230 : vector<4x256xf32>
    %232 = arith.addf %231, %127 : vector<4x256xf32>
    %c1_182 = arith.constant 1 : index
    %c0_183 = arith.constant 0 : index
    %c0_184 = arith.constant 0 : index
    %233 = vector.load %arg9[%c1_182, %c0_183, %c0_184] : memref<2x4x256xf32, #tpu.memory_space<vmem>>, vector<1x4x256xf32>
    %234 = vector.shape_cast %233 : vector<1x4x256xf32> to vector<4x256xf32>
    %235 = vector.shape_cast %232 : vector<4x256xf32> to vector<1x4x256xf32>
    tpu.vector_store %arg9[%c1_182, %c0_183, %c0_184], %235 {strides = array<i32>} : memref<2x4x256xf32, #tpu.memory_space<vmem>>, vector<1x4x256xf32>,
    return
  }
  func.func @transform_0(%arg0: i32) -> (i32, i32, i32) {
    %c0_i32 = arith.constant 0 : i32
    %c0_i32_0 = arith.constant 0 : i32
    %c0_i32_1 = arith.constant 0 : i32
    return %arg0, %c0_i32, %c0_i32_0 : i32, i32, i32
  }
  func.func @transform_1(%arg0: i32) -> (i32, i32) {
    %c0_i32 = arith.constant 0 : i32
    %c0_i32_0 = arith.constant 0 : i32
    %c0_i32_1 = arith.constant 0 : i32
    return %c0_i32, %c0_i32_0 : i32, i32
  }
  func.func @transform_2(%arg0: i32) -> (i32, i32) {
    %c0_i32 = arith.constant 0 : i32
    %c0_i32_0 = arith.constant 0 : i32
    %c0_i32_1 = arith.constant 0 : i32
    return %c0_i32, %c0_i32_0 : i32, i32
  }
  func.func @transform_3(%arg0: i32) -> (i32, i32) {
    %c0_i32 = arith.constant 0 : i32
    %c0_i32_0 = arith.constant 0 : i32
    %c0_i32_1 = arith.constant 0 : i32
    return %c0_i32, %c0_i32_0 : i32, i32
  }
  func.func @transform_4(%arg0: i32) -> (i32, i32) {
    %c0_i32 = arith.constant 0 : i32
    %c0_i32_0 = arith.constant 0 : i32
    %c0_i32_1 = arith.constant 0 : i32
    return %c0_i32, %c0_i32_0 : i32, i32
  }
  func.func @transform_5(%arg0: i32) -> (i32, i32) {
    %c0_i32 = arith.constant 0 : i32
    %c0_i32_0 = arith.constant 0 : i32
    %c0_i32_1 = arith.constant 0 : i32
    return %c0_i32, %c0_i32_0 : i32, i32
  }
  func.func @transform_6(%arg0: i32) -> (i32, i32) {
    %c0_i32 = arith.constant 0 : i32
    %c0_i32_0 = arith.constant 0 : i32
    %c0_i32_1 = arith.constant 0 : i32
    return %c0_i32, %c0_i32_0 : i32, i32
  }
  func.func @transform_7(%arg0: i32) -> (i32, i32) {
    %c0_i32 = arith.constant 0 : i32
    %c0_i32_0 = arith.constant 0 : i32
    %c0_i32_1 = arith.constant 0 : i32
    return %c0_i32, %c0_i32_0 : i32, i32
  }
  func.func @transform_8(%arg0: i32) -> (i32, i32, i32) {
    %c0_i32 = arith.constant 0 : i32
    %c0_i32_0 = arith.constant 0 : i32
    %c0_i32_1 = arith.constant 0 : i32
    return %arg0, %c0_i32, %c0_i32_0 : i32, i32, i32
  }
}

</mosaic_0001>

<llo_original>
// kernel: tpu_custom_call.1
$region0: #{tpu_custom_call.1}
  #allocation0 [shape = 'u32[]', space=smem, size = 0x4, offset = 0x4, fixed_abs, tag = 'smem constant byte address 0x4 - core index']
  #allocation1 [shape = 'u32[144,128]{1,0:T(1,128)}', space=vmem, size = 0x12000, scoped, tag = 'internal scratch']
  #allocation2 [shape = 'f32[36,256]{1,0:T(8,128)}', space=vmem, size = 0xa000, scoped, tag = 'scratch operand']
  #allocation3 [shape = 'f32[1,1]{1,0:T(1,128)S(6)}', space=smem, size = 0x200, scoped, tag = 'scoped memory for tpu_custom_call.1']
  %s0 = inlined_call_operand.vmem [shape: f32[2,4,256], index: 0, kind: input, shape index: {}]
  %s1 = inlined_call_operand.vmem [shape: f32[4,36], index: 1, kind: input, shape index: {}]
  %s2 = inlined_call_operand.<no memory space> [shape: f32[1,1], index: 2, kind: input, shape index: {}]
  %s3 = inlined_call_operand.hbm [shape: f32[4,36], index: 3, kind: input, shape index: {}]
  %s4 = inlined_call_operand.vmem [shape: f32[4,2], index: 4, kind: input, shape index: {}]
  %s5 = inlined_call_operand.vmem [shape: f32[1,2], index: 5, kind: input, shape index: {}]
  %s6 = inlined_call_operand.vmem [shape: f32[4,2], index: 6, kind: input, shape index: {}]
  %s7 = inlined_call_operand.vmem [shape: f32[4,1], index: 7, kind: input, shape index: {}]
  %s8 = inlined_call_operand.hbm [shape: f32[2,4,256], index: 8, kind: output, shape index: {}]
  %s9 = sld [smem:[#allocation0]]
  $region46: #{tpu_custom_call.1} parent=0
    _
  %s11 = ssub.s32 1, %s9
  %s12 = scalar_select 0, %s11, %s9
  %13 = sst [smem:[#allocation3]] %s2
  $region1: #{tpu_custom_call.1} parent=0
    #allocation4 [shape = 'u8[2048]{0}', space=vmem, size = 0x800, scoped, tag = 'input window, operand 3, single buffered']
    #allocation5 [shape = 's32[1]{0}', space=sflag, size = 0x4, scoped, tag = 'scoped memory for tpu_custom_call.1']
    #allocation6 [shape = 's32[1]{0}', space=sflag, size = 0x4, scoped, tag = 'scoped memory for tpu_custom_call.1']
    #allocation7 [shape = 'u8[8192]{0}', space=vmem, size = 0x2000, scoped, tag = 'output window, operand 0, single buffered']
    %14 = vsyncpa [#allocation5], 0
    %15 = vsyncpa [#allocation6], 0
    // Predicated region
    $region2: #{tpu_custom_call.1} parent=1 // pred_check
      _
    $region3: #{tpu_custom_call.1} parent=1 // pred_check_branch
      %17 = sbr.rel (0) target = $region5
    $region4: #{tpu_custom_call.1} parent=1 // pred_region
      _
    $region5: #{tpu_custom_call.1} parent=1 // pred_fallthru
      _
    // Predicated region
    $region6: #{tpu_custom_call.1} parent=1 // pred_check
      _
    $region7: #{tpu_custom_call.1} parent=1 // pred_check_branch
      %19 = sbr.rel (0) target = $region9
    $region8: #{tpu_custom_call.1} parent=1 // pred_region
      _
    $region9: #{tpu_custom_call.1} parent=1 // pred_fallthru
      _
    // Predicated region
    $region10: #{tpu_custom_call.1} parent=1 // pred_check
      _
    $region11: #{tpu_custom_call.1} parent=1 // pred_check_branch
      %21 = sbr.rel (0) target = $region13
    $region12: #{tpu_custom_call.1} parent=1 // pred_region
      _
    $region13: #{tpu_custom_call.1} parent=1 // pred_fallthru
      _
    // Predicated region
    $region14: #{tpu_custom_call.1} parent=1 // pred_check
      _
    $region15: #{tpu_custom_call.1} parent=1 // pred_check_branch
      %23 = sbr.rel (0) target = $region17
    $region16: #{tpu_custom_call.1} parent=1 // pred_region
      %s25 = ssub.s32 64, 64
      %26 = vsyncadd [#allocation5], %s25
      %s28 = sshll.u32 [#allocation4], 4
      %s29 = int_to_ptr.vmem [resolvable:$true] %s28
      %31 = dma.hbm_to_vmem [thread:$0]  %s3, 64, %s29, [#allocation5]
    $region17: #{tpu_custom_call.1} parent=1 // pred_fallthru
      _
    // Predicated region
    $region18: #{tpu_custom_call.1} parent=1 // pred_check
      _
    $region19: #{tpu_custom_call.1} parent=1 // pred_check_branch
      %33 = sbr.rel (0) target = $region21
    $region20: #{tpu_custom_call.1} parent=1 // pred_region
      _
    $region21: #{tpu_custom_call.1} parent=1 // pred_fallthru
      _
    // Predicated region
    $region22: #{tpu_custom_call.1} parent=1 // pred_check
      _
    $region23: #{tpu_custom_call.1} parent=1 // pred_check_branch
      %35 = sbr.rel (0) target = $region25
    $region24: #{tpu_custom_call.1} parent=1 // pred_region
      _
    $region25: #{tpu_custom_call.1} parent=1 // pred_fallthru
      _
    // Predicated region
    $region26: #{tpu_custom_call.1} parent=1 // pred_check
      _
    $region27: #{tpu_custom_call.1} parent=1 // pred_check_branch
      %37 = sbr.rel (0) target = $region29
    $region28: #{tpu_custom_call.1} parent=1 // pred_region
      _
    $region29: #{tpu_custom_call.1} parent=1 // pred_fallthru
      _
    // Predicated region
    $region30: #{tpu_custom_call.1} parent=1 // pred_check
      _
    $region31: #{tpu_custom_call.1} parent=1 // pred_check_branch
      %39 = sbr.rel (0) target = $region33
    $region32: #{tpu_custom_call.1} parent=1 // pred_region
      _
    $region33: #{tpu_custom_call.1} parent=1 // pred_fallthru
      _
    // Predicated region
    $region34: #{tpu_custom_call.1} parent=1 // pred_check
      _
    $region35: #{tpu_custom_call.1} parent=1 // pred_check_branch
      %41 = sbr.rel (0) target = $region37
    $region36: #{tpu_custom_call.1} parent=1 // pred_region
      %42 = dma.done [#allocation5], 64
    $region37: #{tpu_custom_call.1} parent=1 // pred_fallthru
      _
    %v43 = vlaneseq
    %v44 = vand.u32 %v43, 127
    %v45 = vadd.s32 %v44, 128
    %vm46 = vcmp.ge.s32.totalorder %v44, 16
    %vm47 = vcmp.ge.s32.totalorder %v45, 16
    %vm48 = vcmp.lt.s32.totalorder %v44, 240
    %vm49 = vcmp.lt.s32.totalorder %v45, 240
    %v50 = vand.u32 %v44, 15
    %v51 = vand.u32 %v45, 15
    %vm52 = vcmp.ge.s32.totalorder %v50, 1
    %vm53 = vcmp.ge.s32.totalorder %v51, 1
    %vm54 = vcmp.le.s32.totalorder %v50, 14
    %vm55 = vcmp.le.s32.totalorder %v51, 14
    %vm56 = vmand %vm46, %vm52
    %vm57 = vmand %vm47, %vm53
    %vm58 = vmand %vm46, %vm54
    %vm59 = vmand %vm47, %vm55
    %vm60 = vmand %vm48, %vm52
    %vm61 = vmand %vm49, %vm53
    %vm62 = vmand %vm48, %vm54
    %vm63 = vmand %vm49, %vm55
    %s64 = sld [smem:[#allocation3]]
    %v65 = vld [vmem:[%s0] sm:$0xff]
    %v67 = vcombine.high %v65, %v65
    %69 = vrot.lane.b32.xlu0 %v65, 17
    %v70 = vpop.permute.xlu0 %69
    %71 = vrot.lane.b32.xlu0 %v67, 17
    %v72 = vpop.permute.xlu0 %71
    %vm73 = vcmp.lt.s32.totalorder %v44, 17
    %v74 = vsel %vm73, %v70, %v72
    %v75 = vsel %vm73, %v72, %v70
    %v76 = vsel %vm56, %v75, 0.0
    %v77 = vsel %vm57, %v74, 0.0
    %78 = vst [vmem:[#allocation2] sm:$0xf] %v76
    %79 = vst [vmem:[#allocation2 + $0x8] sm:$0xf] %v77
    %80 = vrot.lane.b32.xlu0 %v65, 16
    %v81 = vpop.permute.xlu0 %80
    %82 = vrot.lane.b32.xlu0 %v67, 16
    %v83 = vpop.permute.xlu0 %82
    %vm84 = vcmp.lt.s32.totalorder %v44, 16
    %v85 = vsel %vm84, %v81, %v83
    %v86 = vsel %vm84, %v83, %v81
    %v87 = vsel %vm46, %v86, 0.0
    %v88 = vsel %vm47, %v85, 0.0
    %v91 = vrot.slane %v87, 4
    %v92 = vrot.slane %v88, 4
    %95 = vst [vmem:[#allocation2] sm:$0xf0] %v91
    %96 = vst [vmem:[#allocation2 + $0x8] sm:$0xf0] %v92
    %97 = vrot.lane.b32.xlu0 %v65, 15
    %v98 = vpop.permute.xlu0 %97
    %99 = vrot.lane.b32.xlu0 %v67, 15
    %v100 = vpop.permute.xlu0 %99
    %vm101 = vcmp.lt.s32.totalorder %v44, 15
    %v102 = vsel %vm101, %v98, %v100
    %v103 = vsel %vm101, %v100, %v98
    %v104 = vsel %vm58, %v103, 0.0
    %v105 = vsel %vm59, %v102, 0.0
    %106 = vst [vmem:[#allocation2 + $0x10] sm:$0xf] %v104
    %107 = vst [vmem:[#allocation2 + $0x18] sm:$0xf] %v105
    %108 = vrot.lane.b32.xlu0 %v65, 1
    %v109 = vpop.permute.xlu0 %108
    %110 = vrot.lane.b32.xlu0 %v67, 1
    %v111 = vpop.permute.xlu0 %110
    %vm112 = vcmp.lt.s32.totalorder %v44, 1
    %v113 = vsel %vm112, %v109, %v111
    %v114 = vsel %vm112, %v111, %v109
    %v115 = vsel %vm52, %v114, 0.0
    %v116 = vsel %vm53, %v113, 0.0
    %v119 = vrot.slane %v115, 4
    %v120 = vrot.slane %v116, 4
    %123 = vst [vmem:[#allocation2 + $0x10] sm:$0xf0] %v119
    %124 = vst [vmem:[#allocation2 + $0x18] sm:$0xf0] %v120
    %125 = vst [vmem:[#allocation2 + $0x20] sm:$0xf] %v65
    %126 = vst [vmem:[#allocation2 + $0x28] sm:$0xf] %v67
    %127 = vrot.lane.b32.xlu0 %v65, 127
    %v128 = vpop.permute.xlu0 %127
    %129 = vrot.lane.b32.xlu0 %v67, 127
    %v130 = vpop.permute.xlu0 %129
    %vm131 = vcmp.lt.s32.totalorder %v44, 127
    %v132 = vsel %vm131, %v128, %v130
    %v133 = vsel %vm131, %v130, %v128
    %v134 = vsel %vm54, %v132, 0.0
    %v135 = vsel %vm55, %v133, 0.0
    %v138 = vrot.slane %v134, 4
    %v139 = vrot.slane %v135, 4
    %142 = vst [vmem:[#allocation2 + $0x20] sm:$0xf0] %v138
    %143 = vst [vmem:[#allocation2 + $0x28] sm:$0xf0] %v139
    %144 = vrot.lane.b32.xlu0 %v65, 113
    %v145 = vpop.permute.xlu0 %144
    %146 = vrot.lane.b32.xlu0 %v67, 113
    %v147 = vpop.permute.xlu0 %146
    %vm148 = vcmp.lt.s32.totalorder %v44, 113
    %v149 = vsel %vm148, %v145, %v147
    %v150 = vsel %vm148, %v147, %v145
    %v151 = vsel %vm60, %v149, 0.0
    %v152 = vsel %vm61, %v150, 0.0
    %153 = vst [vmem:[#allocation2 + $0x30] sm:$0xf] %v151
    %154 = vst [vmem:[#allocation2 + $0x38] sm:$0xf] %v152
    %155 = vrot.lane.b32.xlu0 %v65, 112
    %v156 = vpop.permute.xlu0 %155
    %157 = vrot.lane.b32.xlu0 %v67, 112
    %v158 = vpop.permute.xlu0 %157
    %vm159 = vcmp.lt.s32.totalorder %v44, 112
    %v160 = vsel %vm159, %v156, %v158
    %v161 = vsel %vm159, %v158, %v156
    %v162 = vsel %vm48, %v160, 0.0
    %v163 = vsel %vm49, %v161, 0.0
    %v166 = vrot.slane %v162, 4
    %v167 = vrot.slane %v163, 4
    %170 = vst [vmem:[#allocation2 + $0x30] sm:$0xf0] %v166
    %171 = vst [vmem:[#allocation2 + $0x38] sm:$0xf0] %v167
    %172 = vrot.lane.b32.xlu0 %v65, 111
    %v173 = vpop.permute.xlu0 %172
    %174 = vrot.lane.b32.xlu0 %v67, 111
    %v175 = vpop.permute.xlu0 %174
    %vm176 = vcmp.lt.s32.totalorder %v44, 111
    %v177 = vsel %vm176, %v173, %v175
    %v178 = vsel %vm176, %v175, %v173
    %v179 = vsel %vm62, %v177, 0.0
    %v180 = vsel %vm63, %v178, 0.0
    %181 = vst [vmem:[#allocation2 + $0x40] sm:$0xf] %v179
    %182 = vst [vmem:[#allocation2 + $0x48] sm:$0xf] %v180
    %v183 = vld [vmem:[%s1] sm:$0xf]
    %v184 = vld [vmem:[#allocation2] sm:$0xff]
    %v185 = vld [vmem:[#allocation2 + $0x8] sm:$0xff]
    %v186 = vld [vmem:[#allocation2 + $0x10] sm:$0xff]
    %v187 = vld [vmem:[#allocation2 + $0x18] sm:$0xff]
    %v188 = vld [vmem:[#allocation2 + $0x20] sm:$0xff]
    %v189 = vld [vmem:[#allocation2 + $0x28] sm:$0xff]
    %v190 = vld [vmem:[#allocation2 + $0x30] sm:$0xff]
    %v191 = vld [vmem:[#allocation2 + $0x38] sm:$0xff]
    %v192 = vld [vmem:[#allocation2 + $0x40] sm:$0xf]
    %v193 = vld [vmem:[#allocation2 + $0x48] sm:$0xf]
    %vm194 = vcmask 293888
    %v196 = vsel %vm194, %v183, 0
    %vm198 = vcmask 1043456
    %v200 = vsel %vm198, %v192, 0
    %v203 = vsel %vm198, %v193, 0
    %205 = vmatprep.subr.mxu0 0.0
    %206 = vmatpush1.msra.mxu0 0.0
    %207 = vmatprep.subr.mxu0 0.0
    %208 = vmatpush1.msra.mxu0 0.0
    %209 = vmatprep.subr.mxu0 0.0
    %210 = vmatpush1.msra.mxu0 0.0
    %211 = vmatprep.subr.mxu0 0.0
    %212 = vmatpush1.msra.mxu0 0.0
    %213 = vmatprep.subr.mxu0 0.0
    %214 = vmatpush1.msra.mxu0 0.0
    %215 = vmatprep.subr.mxu0 0.0
    %216 = vmatpush1.msra.mxu0 0.0
    %217 = vmatprep.subr.mxu0 0.0
    %218 = vmatpush1.msra.mxu0 0.0
    %219 = vmatprep.subr.mxu0 0.0
    %220 = vmatpush1.msra.mxu0 0.0
    %221 = vmatprep.subr.mxu0 0.0
    %222 = vmatpush1.msra.mxu0 0.0
    %223 = vmatprep.subr.mxu0 0.0
    %224 = vmatpush1.msra.mxu0 0.0
    %225 = vmatprep.subr.mxu0 0.0
    %226 = vmatpush1.msra.mxu0 0.0
    %227 = vmatprep.subr.mxu0 %v203
    %228 = vmatpush1.msra.mxu0 %v200
    %229 = vmatprep.subr.mxu0 %v191
    %230 = vmatpush1.msra.mxu0 %v190
    %231 = vmatprep.subr.mxu0 %v189
    %232 = vmatpush1.msra.mxu0 %v188
    %233 = vmatprep.subr.mxu0 %v187
    %234 = vmatpush1.msra.mxu0 %v186
    %235 = vmatprep.subr.mxu0 %v185
    %236 = vmatpush1.msra.mxu0 %v184
    %237 = vmatprep.subr.mxu0 0.0
    %238 = vmatpush2.msra.mxu0 0.0
    %239 = vmatprep.subr.mxu0 0.0
    %240 = vmatpush2.msra.mxu0 0.0
    %241 = vmatprep.subr.mxu0 0.0
    %242 = vmatpush2.msra.mxu0 0.0
    %243 = vmatprep.subr.mxu0 0.0
    %244 = vmatpush2.msra.mxu0 0.0
    %245 = vmatprep.subr.mxu0 0.0
    %246 = vmatpush2.msra.mxu0 0.0
    %247 = vmatprep.subr.mxu0 0.0
    %248 = vmatpush2.msra.mxu0 0.0
    %249 = vmatprep.subr.mxu0 0.0
    %250 = vmatpush2.msra.mxu0 0.0
    %251 = vmatprep.subr.mxu0 0.0
    %252 = vmatpush2.msra.mxu0 0.0
    %253 = vmatprep.subr.mxu0 0.0
    %254 = vmatpush2.msra.mxu0 0.0
    %255 = vmatprep.subr.mxu0 0.0
    %256 = vmatpush2.msra.mxu0 0.0
    %257 = vmatprep.subr.mxu0 0.0
    %258 = vmatpush2.msra.mxu0 0.0
    %259 = vmatprep.subr.mxu0 0.0
    %260 = vmatpush2.msra.mxu0 0.0
    %261 = vmatprep.subr.mxu0 0.0
    %262 = vmatpush2.msra.mxu0 0.0
    %263 = vmatprep.subr.mxu0 0.0
    %264 = vmatpush2.msra.mxu0 0.0
    %265 = vmatprep.subr.mxu0 0.0
    %266 = vmatpush2.msra.mxu0 0.0
    %267 = vmatprep.subr.mxu0 0.0
    %268 = vmatpush2.msra.mxu0 0.0
    %269 = vmatprep.mubr.f32.mxu0 0.0
    %270 = vmatmul.mubr.f32.gmra.mxu0 %v196
    %v271 = vpop.f32.mrf.mxu0
    %v272 = vadd.f32 0.0, %v271
    %v273 = vpop.f32.mrf.mxu0
    %v274 = vadd.f32 0.0, %v273
    %275 = vdwg.mxu0
    %vm276 = vcmp.gt.f32.partialorder %v272, 0.0
    %vm277 = vcmp.gt.f32.partialorder %v274, 0.0
    %v278 = vstv %s64
    %v279 = vmul.f32 %v278, %v272
    %v280 = vmul.f32 %v278, %v274
    %v281 = vsel %vm276, %v272, %v279
    %v282 = vsel %vm277, %v274, %v280
    %283 = vrot.lane.b32.xlu0 %v281, 17
    %v284 = vpop.permute.xlu0 %283
    %285 = vrot.lane.b32.xlu0 %v282, 17
    %v286 = vpop.permute.xlu0 %285
    %v287 = vsel %vm73, %v284, %v286
    %v288 = vsel %vm73, %v286, %v284
    %v289 = vsel %vm56, %v288, 0.0
    %v290 = vsel %vm57, %v287, 0.0
    %291 = vst [vmem:[#allocation2] sm:$0xf] %v289
    %292 = vst [vmem:[#allocation2 + $0x8] sm:$0xf] %v290
    %293 = vrot.lane.b32.xlu0 %v281, 16
    %v294 = vpop.permute.xlu0 %293
    %295 = vrot.lane.b32.xlu0 %v282, 16
    %v296 = vpop.permute.xlu0 %295
    %v297 = vsel %vm84, %v294, %v296
    %v298 = vsel %vm84, %v296, %v294
    %v299 = vsel %vm46, %v298, 0.0
    %v300 = vsel %vm47, %v297, 0.0
    %v303 = vrot.slane %v299, 4
    %v304 = vrot.slane %v300, 4
    %307 = vst [vmem:[#allocation2] sm:$0xf0] %v303
    %308 = vst [vmem:[#allocation2 + $0x8] sm:$0xf0] %v304
    %309 = vrot.lane.b32.xlu0 %v281, 15
    %v310 = vpop.permute.xlu0 %309
    %311 = vrot.lane.b32.xlu0 %v282, 15
    %v312 = vpop.permute.xlu0 %311
    %v313 = vsel %vm101, %v310, %v312
    %v314 = vsel %vm101, %v312, %v310
    %v315 = vsel %vm58, %v314, 0.0
    %v316 = vsel %vm59, %v313, 0.0
    %317 = vst [vmem:[#allocation2 + $0x10] sm:$0xf] %v315
    %318 = vst [vmem:[#allocation2 + $0x18] sm:$0xf] %v316
    %319 = vrot.lane.b32.xlu0 %v281, 1
    %v320 = vpop.permute.xlu0 %319
    %321 = vrot.lane.b32.xlu0 %v282, 1
    %v322 = vpop.permute.xlu0 %321
    %v323 = vsel %vm112, %v320, %v322
    %v324 = vsel %vm112, %v322, %v320
    %v325 = vsel %vm52, %v324, 0.0
    %v326 = vsel %vm53, %v323, 0.0
    %v329 = vrot.slane %v325, 4
    %v330 = vrot.slane %v326, 4
    %333 = vst [vmem:[#allocation2 + $0x10] sm:$0xf0] %v329
    %334 = vst [vmem:[#allocation2 + $0x18] sm:$0xf0] %v330
    %335 = vst [vmem:[#allocation2 + $0x20] sm:$0xf] %v281
    %336 = vst [vmem:[#allocation2 + $0x28] sm:$0xf] %v282
    %337 = vrot.lane.b32.xlu0 %v281, 127
    %v338 = vpop.permute.xlu0 %337
    %339 = vrot.lane.b32.xlu0 %v282, 127
    %v340 = vpop.permute.xlu0 %339
    %v341 = vsel %vm131, %v338, %v340
    %v342 = vsel %vm131, %v340, %v338
    %v343 = vsel %vm54, %v341, 0.0
    %v344 = vsel %vm55, %v342, 0.0
    %v347 = vrot.slane %v343, 4
    %v348 = vrot.slane %v344, 4
    %351 = vst [vmem:[#allocation2 + $0x20] sm:$0xf0] %v347
    %352 = vst [vmem:[#allocation2 + $0x28] sm:$0xf0] %v348
    %353 = vrot.lane.b32.xlu0 %v281, 113
    %v354 = vpop.permute.xlu0 %353
    %355 = vrot.lane.b32.xlu0 %v282, 113
    %v356 = vpop.permute.xlu0 %355
    %v357 = vsel %vm148, %v354, %v356
    %v358 = vsel %vm148, %v356, %v354
    %v359 = vsel %vm60, %v357, 0.0
    %v360 = vsel %vm61, %v358, 0.0
    %361 = vst [vmem:[#allocation2 + $0x30] sm:$0xf] %v359
    %362 = vst [vmem:[#allocation2 + $0x38] sm:$0xf] %v360
    %363 = vrot.lane.b32.xlu0 %v281, 112
    %v364 = vpop.permute.xlu0 %363
    %365 = vrot.lane.b32.xlu0 %v282, 112
    %v366 = vpop.permute.xlu0 %365
    %v367 = vsel %vm159, %v364, %v366
    %v368 = vsel %vm159, %v366, %v364
    %v369 = vsel %vm48, %v367, 0.0
    %v370 = vsel %vm49, %v368, 0.0
    %v373 = vrot.slane %v369, 4
    %v374 = vrot.slane %v370, 4
    %377 = vst [vmem:[#allocation2 + $0x30] sm:$0xf0] %v373
    %378 = vst [vmem:[#allocation2 + $0x38] sm:$0xf0] %v374
    %379 = vrot.lane.b32.xlu0 %v281, 111
    %v380 = vpop.permute.xlu0 %379
    %381 = vrot.lane.b32.xlu0 %v282, 111
    %v382 = vpop.permute.xlu0 %381
    %v383 = vsel %vm176, %v380, %v382
    %v384 = vsel %vm176, %v382, %v380
    %v385 = vsel %vm62, %v383, 0.0
    %v386 = vsel %vm63, %v384, 0.0
    %387 = vst [vmem:[#allocation2 + $0x40] sm:$0xf] %v385
    %388 = vst [vmem:[#allocation2 + $0x48] sm:$0xf] %v386
    %v389 = vld [vmem:[#allocation4] sm:$0xf]
    %v390 = vld [vmem:[#allocation2] sm:$0xff]
    %v391 = vld [vmem:[#allocation2 + $0x8] sm:$0xff]
    %v392 = vld [vmem:[#allocation2 + $0x10] sm:$0xff]
    %v393 = vld [vmem:[#allocation2 + $0x18] sm:$0xff]
    %v394 = vld [vmem:[#allocation2 + $0x20] sm:$0xff]
    %v395 = vld [vmem:[#allocation2 + $0x28] sm:$0xff]
    %v396 = vld [vmem:[#allocation2 + $0x30] sm:$0xff]
    %v397 = vld [vmem:[#allocation2 + $0x38] sm:$0xff]
    %v398 = vld [vmem:[#allocation2 + $0x40] sm:$0xf]
    %v399 = vld [vmem:[#allocation2 + $0x48] sm:$0xf]
    %v401 = vsel %vm194, %v389, 0
    %v404 = vsel %vm198, %v398, 0
    %v407 = vsel %vm198, %v399, 0
    %409 = vmatprep.subr.mxu0 0.0
    %410 = vmatpush1.msra.mxu0 0.0
    %411 = vmatprep.subr.mxu0 0.0
    %412 = vmatpush1.msra.mxu0 0.0
    %413 = vmatprep.subr.mxu0 0.0
    %414 = vmatpush1.msra.mxu0 0.0
    %415 = vmatprep.subr.mxu0 0.0
    %416 = vmatpush1.msra.mxu0 0.0
    %417 = vmatprep.subr.mxu0 0.0
    %418 = vmatpush1.msra.mxu0 0.0
    %419 = vmatprep.subr.mxu0 0.0
    %420 = vmatpush1.msra.mxu0 0.0
    %421 = vmatprep.subr.mxu0 0.0
    %422 = vmatpush1.msra.mxu0 0.0
    %423 = vmatprep.subr.mxu0 0.0
    %424 = vmatpush1.msra.mxu0 0.0
    %425 = vmatprep.subr.mxu0 0.0
    %426 = vmatpush1.msra.mxu0 0.0
    %427 = vmatprep.subr.mxu0 0.0
    %428 = vmatpush1.msra.mxu0 0.0
    %429 = vmatprep.subr.mxu0 0.0
    %430 = vmatpush1.msra.mxu0 0.0
    %431 = vmatprep.subr.mxu0 %v407
    %432 = vmatpush1.msra.mxu0 %v404
    %433 = vmatprep.subr.mxu0 %v397
    %434 = vmatpush1.msra.mxu0 %v396
    %435 = vmatprep.subr.mxu0 %v395
    %436 = vmatpush1.msra.mxu0 %v394
    %437 = vmatprep.subr.mxu0 %v393
    %438 = vmatpush1.msra.mxu0 %v392
    %439 = vmatprep.subr.mxu0 %v391
    %440 = vmatpush1.msra.mxu0 %v390
    %441 = vmatprep.subr.mxu0 0.0
    %442 = vmatpush2.msra.mxu0 0.0
    %443 = vmatprep.subr.mxu0 0.0
    %444 = vmatpush2.msra.mxu0 0.0
    %445 = vmatprep.subr.mxu0 0.0
    %446 = vmatpush2.msra.mxu0 0.0
    %447 = vmatprep.subr.mxu0 0.0
    %448 = vmatpush2.msra.mxu0 0.0
    %449 = vmatprep.subr.mxu0 0.0
    %450 = vmatpush2.msra.mxu0 0.0
    %451 = vmatprep.subr.mxu0 0.0
    %452 = vmatpush2.msra.mxu0 0.0
    %453 = vmatprep.subr.mxu0 0.0
    %454 = vmatpush2.msra.mxu0 0.0
    %455 = vmatprep.subr.mxu0 0.0
    %456 = vmatpush2.msra.mxu0 0.0
    %457 = vmatprep.subr.mxu0 0.0
    %458 = vmatpush2.msra.mxu0 0.0
    %459 = vmatprep.subr.mxu0 0.0
    %460 = vmatpush2.msra.mxu0 0.0
    %461 = vmatprep.subr.mxu0 0.0
    %462 = vmatpush2.msra.mxu0 0.0
    %463 = vmatprep.subr.mxu0 0.0
    %464 = vmatpush2.msra.mxu0 0.0
    %465 = vmatprep.subr.mxu0 0.0
    %466 = vmatpush2.msra.mxu0 0.0
    %467 = vmatprep.subr.mxu0 0.0
    %468 = vmatpush2.msra.mxu0 0.0
    %469 = vmatprep.subr.mxu0 0.0
    %470 = vmatpush2.msra.mxu0 0.0
    %471 = vmatprep.subr.mxu0 0.0
    %472 = vmatpush2.msra.mxu0 0.0
    %473 = vmatprep.mubr.f32.mxu0 0.0
    %474 = vmatmul.mubr.f32.gmra.mxu0 %v401
    %v475 = vpop.f32.mrf.mxu0
    %v476 = vadd.f32 0.0, %v475
    %v477 = vpop.f32.mrf.mxu0
    %v478 = vadd.f32 0.0, %v477
    %479 = vdwg.mxu0
    %v480 = vsel %vm198, %v476, 0.0
    %v481 = vsel %vm198, %v478, 0.0
    %v482 = vadd.f32 %v480, %v481
    %483 = vadd.xlane.f32.xlu0 %v482
    %v484 = vpop.xlane.xlu0 %483
    %v485 = vrcp.pop 256.0
    %v486 = vmul.f32 %v484, %v485
    %v487 = vld [vmem:[%s4] sm:$0xf]
    %v488 = vmul.f32 %v486, %v487
    %vm489 = vcmask 11264
    %v490 = vsel %vm489, %v488, 0.0
    %v491 = vrot.slane %v490, 4
    %v492 = vadd.f32 %v490, %v491
    %v493 = vrot.slane %v492, 2
    %v494 = vadd.f32 %v492, %v493
    %v495 = vrot.slane %v494, 1
    %v496 = vadd.f32 %v494, %v495
    %v497 = vld [vmem:[%s5] sm:$0x1]
    %v498 = vadd.f32 %v496, %v497
    %v499 = vmax.f32 %v498, 0.0
    %v500 = vld [vmem:[%s6] sm:$0xf]
    %v501 = vlaneseq
    %v502 = vshrl.u32 %v501, 7
    %v503 = vsub.s32 0, %v502
    %v504 = vrot.slane %v499, %v503
    %v505 = vmul.f32 %v500, %v504
    %v506 = vsel %vm489, %v505, 0.0
    %507 = vadd.xlane.f32.xlu0 %v506
    %v508 = vpop.xlane.xlu0 %507
    %v509 = vld [vmem:[%s7] sm:$0xf]
    %v510 = vadd.f32 %v508, %v509
    %v511 = vxor.u32 %v510, 2147483648
    %v512 = vmul.f32 %v511, 1.442695
    %v513 = vpow.pop %v512
    %v514 = vadd.f32 %v513, 1.0
    %v515 = vrcp.pop %v514
    %v516 = vmul.f32 1.0, %v515
    %518 = vset.pattern.permute.xlu0 0
    %519 = vperm.xlu0 %518, %v516
    %v520 = vpop.permute.xlu0 %519
    %v522 = vmul.f32 %v476, %v520
    %v523 = vmul.f32 %v478, %v520
    %v524 = vadd.f32 %v522, %v65
    %v525 = vadd.f32 %v523, %v67
    %v528 = vcombine.low %v524, %v525
    %530 = vst [vmem:[#allocation7] sm:$0xff] %v528
    %s531 = scalar_lea.vmem %s0, 8
    %v532 = vld [vmem:[%s531] sm:$0xff]
    %v534 = vcombine.high %v532, %v532
    %536 = vrot.lane.b32.xlu0 %v532, 17
    %v537 = vpop.permute.xlu0 %536
    %538 = vrot.lane.b32.xlu0 %v534, 17
    %v539 = vpop.permute.xlu0 %538
    %v540 = vsel %vm73, %v537, %v539
    %v541 = vsel %vm73, %v539, %v537
    %v542 = vsel %vm56, %v541, 0.0
    %v543 = vsel %vm57, %v540, 0.0
    %544 = vst [vmem:[#allocation2] sm:$0xf] %v542
    %545 = vst [vmem:[#allocation2 + $0x8] sm:$0xf] %v543
    %546 = vrot.lane.b32.xlu0 %v532, 16
    %v547 = vpop.permute.xlu0 %546
    %548 = vrot.lane.b32.xlu0 %v534, 16
    %v549 = vpop.permute.xlu0 %548
    %v550 = vsel %vm84, %v547, %v549
    %v551 = vsel %vm84, %v549, %v547
    %v552 = vsel %vm46, %v551, 0.0
    %v553 = vsel %vm47, %v550, 0.0
    %v556 = vrot.slane %v552, 4
    %v557 = vrot.slane %v553, 4
    %560 = vst [vmem:[#allocation2] sm:$0xf0] %v556
    %561 = vst [vmem:[#allocation2 + $0x8] sm:$0xf0] %v557
    %562 = vrot.lane.b32.xlu0 %v532, 15
    %v563 = vpop.permute.xlu0 %562
    %564 = vrot.lane.b32.xlu0 %v534, 15
    %v565 = vpop.permute.xlu0 %564
    %v566 = vsel %vm101, %v563, %v565
    %v567 = vsel %vm101, %v565, %v563
    %v568 = vsel %vm58, %v567, 0.0
    %v569 = vsel %vm59, %v566, 0.0
    %570 = vst [vmem:[#allocation2 + $0x10] sm:$0xf] %v568
    %571 = vst [vmem:[#allocation2 + $0x18] sm:$0xf] %v569
    %572 = vrot.lane.b32.xlu0 %v532, 1
    %v573 = vpop.permute.xlu0 %572
    %574 = vrot.lane.b32.xlu0 %v534, 1
    %v575 = vpop.permute.xlu0 %574
    %v576 = vsel %vm112, %v573, %v575
    %v577 = vsel %vm112, %v575, %v573
    %v578 = vsel %vm52, %v577, 0.0
    %v579 = vsel %vm53, %v576, 0.0
    %v582 = vrot.slane %v578, 4
    %v583 = vrot.slane %v579, 4
    %586 = vst [vmem:[#allocation2 + $0x10] sm:$0xf0] %v582
    %587 = vst [vmem:[#allocation2 + $0x18] sm:$0xf0] %v583
    %588 = vst [vmem:[#allocation2 + $0x20] sm:$0xf] %v532
    %589 = vst [vmem:[#allocation2 + $0x28] sm:$0xf] %v534
    %590 = vrot.lane.b32.xlu0 %v532, 127
    %v591 = vpop.permute.xlu0 %590
    %592 = vrot.lane.b32.xlu0 %v534, 127
    %v593 = vpop.permute.xlu0 %592
    %v594 = vsel %vm131, %v591, %v593
    %v595 = vsel %vm131, %v593, %v591
    %v596 = vsel %vm54, %v594, 0.0
    %v597 = vsel %vm55, %v595, 0.0
    %v600 = vrot.slane %v596, 4
    %v601 = vrot.slane %v597, 4
    %604 = vst [vmem:[#allocation2 + $0x20] sm:$0xf0] %v600
    %605 = vst [vmem:[#allocation2 + $0x28] sm:$0xf0] %v601
    %606 = vrot.lane.b32.xlu0 %v532, 113
    %v607 = vpop.permute.xlu0 %606
    %608 = vrot.lane.b32.xlu0 %v534, 113
    %v609 = vpop.permute.xlu0 %608
    %v610 = vsel %vm148, %v607, %v609
    %v611 = vsel %vm148, %v609, %v607
    %v612 = vsel %vm60, %v610, 0.0
    %v613 = vsel %vm61, %v611, 0.0
    %614 = vst [vmem:[#allocation2 + $0x30] sm:$0xf] %v612
    %615 = vst [vmem:[#allocation2 + $0x38] sm:$0xf] %v613
    %616 = vrot.lane.b32.xlu0 %v532, 112
    %v617 = vpop.permute.xlu0 %616
    %618 = vrot.lane.b32.xlu0 %v534, 112
    %v619 = vpop.permute.xlu0 %618
    %v620 = vsel %vm159, %v617, %v619
    %v621 = vsel %vm159, %v619, %v617
    %v622 = vsel %vm48, %v620, 0.0
    %v623 = vsel %vm49, %v621, 0.0
    %v626 = vrot.slane %v622, 4
    %v627 = vrot.slane %v623, 4
    %630 = vst [vmem:[#allocation2 + $0x30] sm:$0xf0] %v626
    %631 = vst [vmem:[#allocation2 + $0x38] sm:$0xf0] %v627
    %632 = vrot.lane.b32.xlu0 %v532, 111
    %v633 = vpop.permute.xlu0 %632
    %634 = vrot.lane.b32.xlu0 %v534, 111
    %v635 = vpop.permute.xlu0 %634
    %v636 = vsel %vm176, %v633, %v635
    %v637 = vsel %vm176, %v635, %v633
    %v638 = vsel %vm62, %v636, 0.0
    %v639 = vsel %vm63, %v637, 0.0
    %640 = vst [vmem:[#allocation2 + $0x40] sm:$0xf] %v638
    %641 = vst [vmem:[#allocation2 + $0x48] sm:$0xf] %v639
    %v642 = vld [vmem:[%s1] sm:$0xf]
    %v643 = vld [vmem:[#allocation2] sm:$0xff]
    %v644 = vld [vmem:[#allocation2 + $0x8] sm:$0xff]
    %v645 = vld [vmem:[#allocation2 + $0x10] sm:$0xff]
    %v646 = vld [vmem:[#allocation2 + $0x18] sm:$0xff]
    %v647 = vld [vmem:[#allocation2 + $0x20] sm:$0xff]
    %v648 = vld [vmem:[#allocation2 + $0x28] sm:$0xff]
    %v649 = vld [vmem:[#allocation2 + $0x30] sm:$0xff]
    %v650 = vld [vmem:[#allocation2 + $0x38] sm:$0xff]
    %v651 = vld [vmem:[#allocation2 + $0x40] sm:$0xf]
    %v652 = vld [vmem:[#allocation2 + $0x48] sm:$0xf]
    %v654 = vsel %vm194, %v642, 0
    %v657 = vsel %vm198, %v651, 0
    %v660 = vsel %vm198, %v652, 0
    %662 = vmatprep.subr.mxu0 0.0
    %663 = vmatpush1.msra.mxu0 0.0
    %664 = vmatprep.subr.mxu0 0.0
    %665 = vmatpush1.msra.mxu0 0.0
    %666 = vmatprep.subr.mxu0 0.0
    %667 = vmatpush1.msra.mxu0 0.0
    %668 = vmatprep.subr.mxu0 0.0
    %669 = vmatpush1.msra.mxu0 0.0
    %670 = vmatprep.subr.mxu0 0.0
    %671 = vmatpush1.msra.mxu0 0.0
    %672 = vmatprep.subr.mxu0 0.0
    %673 = vmatpush1.msra.mxu0 0.0
    %674 = vmatprep.subr.mxu0 0.0
    %675 = vmatpush1.msra.mxu0 0.0
    %676 = vmatprep.subr.mxu0 0.0
    %677 = vmatpush1.msra.mxu0 0.0
    %678 = vmatprep.subr.mxu0 0.0
    %679 = vmatpush1.msra.mxu0 0.0
    %680 = vmatprep.subr.mxu0 0.0
    %681 = vmatpush1.msra.mxu0 0.0
    %682 = vmatprep.subr.mxu0 0.0
    %683 = vmatpush1.msra.mxu0 0.0
    %684 = vmatprep.subr.mxu0 %v660
    %685 = vmatpush1.msra.mxu0 %v657
    %686 = vmatprep.subr.mxu0 %v650
    %687 = vmatpush1.msra.mxu0 %v649
    %688 = vmatprep.subr.mxu0 %v648
    %689 = vmatpush1.msra.mxu0 %v647
    %690 = vmatprep.subr.mxu0 %v646
    %691 = vmatpush1.msra.mxu0 %v645
    %692 = vmatprep.subr.mxu0 %v644
    %693 = vmatpush1.msra.mxu0 %v643
    %694 = vmatprep.subr.mxu0 0.0
    %695 = vmatpush2.msra.mxu0 0.0
    %696 = vmatprep.subr.mxu0 0.0
    %697 = vmatpush2.msra.mxu0 0.0
    %698 = vmatprep.subr.mxu0 0.0
    %699 = vmatpush2.msra.mxu0 0.0
    %700 = vmatprep.subr.mxu0 0.0
    %701 = vmatpush2.msra.mxu0 0.0
    %702 = vmatprep.subr.mxu0 0.0
    %703 = vmatpush2.msra.mxu0 0.0
    %704 = vmatprep.subr.mxu0 0.0
    %705 = vmatpush2.msra.mxu0 0.0
    %706 = vmatprep.subr.mxu0 0.0
    %707 = vmatpush2.msra.mxu0 0.0
    %708 = vmatprep.subr.mxu0 0.0
    %709 = vmatpush2.msra.mxu0 0.0
    %710 = vmatprep.subr.mxu0 0.0
    %711 = vmatpush2.msra.mxu0 0.0
    %712 = vmatprep.subr.mxu0 0.0
    %713 = vmatpush2.msra.mxu0 0.0
    %714 = vmatprep.subr.mxu0 0.0
    %715 = vmatpush2.msra.mxu0 0.0
    %716 = vmatprep.subr.mxu0 0.0
    %717 = vmatpush2.msra.mxu0 0.0
    %718 = vmatprep.subr.mxu0 0.0
    %719 = vmatpush2.msra.mxu0 0.0
    %720 = vmatprep.subr.mxu0 0.0
    %721 = vmatpush2.msra.mxu0 0.0
    %722 = vmatprep.subr.mxu0 0.0
    %723 = vmatpush2.msra.mxu0 0.0
    %724 = vmatprep.subr.mxu0 0.0
    %725 = vmatpush2.msra.mxu0 0.0
    %726 = vmatprep.mubr.f32.mxu0 0.0
    %727 = vmatmul.mubr.f32.gmra.mxu0 %v654
    %v728 = vpop.f32.mrf.mxu0
    %v729 = vadd.f32 0.0, %v728
    %v730 = vpop.f32.mrf.mxu0
    %v731 = vadd.f32 0.0, %v730
    %732 = vdwg.mxu0
    %vm733 = vcmp.gt.f32.partialorder %v729, 0.0
    %vm734 = vcmp.gt.f32.partialorder %v731, 0.0
    %v735 = vmul.f32 %v278, %v729
    %v736 = vmul.f32 %v278, %v731
    %v737 = vsel %vm733, %v729, %v735
    %v738 = vsel %vm734, %v731, %v736
    %739 = vrot.lane.b32.xlu0 %v737, 17
    %v740 = vpop.permute.xlu0 %739
    %741 = vrot.lane.b32.xlu0 %v738, 17
    %v742 = vpop.permute.xlu0 %741
    %v743 = vsel %vm73, %v740, %v742
    %v744 = vsel %vm73, %v742, %v740
    %v745 = vsel %vm56, %v744, 0.0
    %v746 = vsel %vm57, %v743, 0.0
    %747 = vst [vmem:[#allocation2] sm:$0xf] %v745
    %748 = vst [vmem:[#allocation2 + $0x8] sm:$0xf] %v746
    %749 = vrot.lane.b32.xlu0 %v737, 16
    %v750 = vpop.permute.xlu0 %749
    %751 = vrot.lane.b32.xlu0 %v738, 16
    %v752 = vpop.permute.xlu0 %751
    %v753 = vsel %vm84, %v750, %v752
    %v754 = vsel %vm84, %v752, %v750
    %v755 = vsel %vm46, %v754, 0.0
    %v756 = vsel %vm47, %v753, 0.0
    %v759 = vrot.slane %v755, 4
    %v760 = vrot.slane %v756, 4
    %763 = vst [vmem:[#allocation2] sm:$0xf0] %v759
    %764 = vst [vmem:[#allocation2 + $0x8] sm:$0xf0] %v760
    %765 = vrot.lane.b32.xlu0 %v737, 15
    %v766 = vpop.permute.xlu0 %765
    %767 = vrot.lane.b32.xlu0 %v738, 15
    %v768 = vpop.permute.xlu0 %767
    %v769 = vsel %vm101, %v766, %v768
    %v770 = vsel %vm101, %v768, %v766
    %v771 = vsel %vm58, %v770, 0.0
    %v772 = vsel %vm59, %v769, 0.0
    %773 = vst [vmem:[#allocation2 + $0x10] sm:$0xf] %v771
    %774 = vst [vmem:[#allocation2 + $0x18] sm:$0xf] %v772
    %775 = vrot.lane.b32.xlu0 %v737, 1
    %v776 = vpop.permute.xlu0 %775
    %777 = vrot.lane.b32.xlu0 %v738, 1
    %v778 = vpop.permute.xlu0 %777
    %v779 = vsel %vm112, %v776, %v778
    %v780 = vsel %vm112, %v778, %v776
    %v781 = vsel %vm52, %v780, 0.0
    %v782 = vsel %vm53, %v779, 0.0
    %v785 = vrot.slane %v781, 4
    %v786 = vrot.slane %v782, 4
    %789 = vst [vmem:[#allocation2 + $0x10] sm:$0xf0] %v785
    %790 = vst [vmem:[#allocation2 + $0x18] sm:$0xf0] %v786
    %791 = vst [vmem:[#allocation2 + $0x20] sm:$0xf] %v737
    %792 = vst [vmem:[#allocation2 + $0x28] sm:$0xf] %v738
    %793 = vrot.lane.b32.xlu0 %v737, 127
    %v794 = vpop.permute.xlu0 %793
    %795 = vrot.lane.b32.xlu0 %v738, 127
    %v796 = vpop.permute.xlu0 %795
    %v797 = vsel %vm131, %v794, %v796
    %v798 = vsel %vm131, %v796, %v794
    %v799 = vsel %vm54, %v797, 0.0
    %v800 = vsel %vm55, %v798, 0.0
    %v803 = vrot.slane %v799, 4
    %v804 = vrot.slane %v800, 4
    %807 = vst [vmem:[#allocation2 + $0x20] sm:$0xf0] %v803
    %808 = vst [vmem:[#allocation2 + $0x28] sm:$0xf0] %v804
    %809 = vrot.lane.b32.xlu0 %v737, 113
    %v810 = vpop.permute.xlu0 %809
    %811 = vrot.lane.b32.xlu0 %v738, 113
    %v812 = vpop.permute.xlu0 %811
    %v813 = vsel %vm148, %v810, %v812
    %v814 = vsel %vm148, %v812, %v810
    %v815 = vsel %vm60, %v813, 0.0
    %v816 = vsel %vm61, %v814, 0.0
    %817 = vst [vmem:[#allocation2 + $0x30] sm:$0xf] %v815
    %818 = vst [vmem:[#allocation2 + $0x38] sm:$0xf] %v816
    %819 = vrot.lane.b32.xlu0 %v737, 112
    %v820 = vpop.permute.xlu0 %819
    %821 = vrot.lane.b32.xlu0 %v738, 112
    %v822 = vpop.permute.xlu0 %821
    %v823 = vsel %vm159, %v820, %v822
    %v824 = vsel %vm159, %v822, %v820
    %v825 = vsel %vm48, %v823, 0.0
    %v826 = vsel %vm49, %v824, 0.0
    %v829 = vrot.slane %v825, 4
    %v830 = vrot.slane %v826, 4
    %833 = vst [vmem:[#allocation2 + $0x30] sm:$0xf0] %v829
    %834 = vst [vmem:[#allocation2 + $0x38] sm:$0xf0] %v830
    %835 = vrot.lane.b32.xlu0 %v737, 111
    %v836 = vpop.permute.xlu0 %835
    %837 = vrot.lane.b32.xlu0 %v738, 111
    %v838 = vpop.permute.xlu0 %837
    %v839 = vsel %vm176, %v836, %v838
    %v840 = vsel %vm176, %v838, %v836
    %v841 = vsel %vm62, %v839, 0.0
    %v842 = vsel %vm63, %v840, 0.0
    %843 = vst [vmem:[#allocation2 + $0x40] sm:$0xf] %v841
    %844 = vst [vmem:[#allocation2 + $0x48] sm:$0xf] %v842
    %v845 = vld [vmem:[#allocation4] sm:$0xf]
    %v846 = vld [vmem:[#allocation2] sm:$0xff]
    %v847 = vld [vmem:[#allocation2 + $0x8] sm:$0xff]
    %v848 = vld [vmem:[#allocation2 + $0x10] sm:$0xff]
    %v849 = vld [vmem:[#allocation2 + $0x18] sm:$0xff]
    %v850 = vld [vmem:[#allocation2 + $0x20] sm:$0xff]
    %v851 = vld [vmem:[#allocation2 + $0x28] sm:$0xff]
    %v852 = vld [vmem:[#allocation2 + $0x30] sm:$0xff]
    %v853 = vld [vmem:[#allocation2 + $0x38] sm:$0xff]
    %v854 = vld [vmem:[#allocation2 + $0x40] sm:$0xf]
    %v855 = vld [vmem:[#allocation2 + $0x48] sm:$0xf]
    %v857 = vsel %vm194, %v845, 0
    %v860 = vsel %vm198, %v854, 0
    %v863 = vsel %vm198, %v855, 0
    %865 = vmatprep.subr.mxu0 0.0
    %866 = vmatpush1.msra.mxu0 0.0
    %867 = vmatprep.subr.mxu0 0.0
    %868 = vmatpush1.msra.mxu0 0.0
    %869 = vmatprep.subr.mxu0 0.0
    %870 = vmatpush1.msra.mxu0 0.0
    %871 = vmatprep.subr.mxu0 0.0
    %872 = vmatpush1.msra.mxu0 0.0
    %873 = vmatprep.subr.mxu0 0.0
    %874 = vmatpush1.msra.mxu0 0.0
    %875 = vmatprep.subr.mxu0 0.0
    %876 = vmatpush1.msra.mxu0 0.0
    %877 = vmatprep.subr.mxu0 0.0
    %878 = vmatpush1.msra.mxu0 0.0
    %879 = vmatprep.subr.mxu0 0.0
    %880 = vmatpush1.msra.mxu0 0.0
    %881 = vmatprep.subr.mxu0 0.0
    %882 = vmatpush1.msra.mxu0 0.0
    %883 = vmatprep.subr.mxu0 0.0
    %884 = vmatpush1.msra.mxu0 0.0
    %885 = vmatprep.subr.mxu0 0.0
    %886 = vmatpush1.msra.mxu0 0.0
    %887 = vmatprep.subr.mxu0 %v863
    %888 = vmatpush1.msra.mxu0 %v860
    %889 = vmatprep.subr.mxu0 %v853
    %890 = vmatpush1.msra.mxu0 %v852
    %891 = vmatprep.subr.mxu0 %v851
    %892 = vmatpush1.msra.mxu0 %v850
    %893 = vmatprep.subr.mxu0 %v849
    %894 = vmatpush1.msra.mxu0 %v848
    %895 = vmatprep.subr.mxu0 %v847
    %896 = vmatpush1.msra.mxu0 %v846
    %897 = vmatprep.subr.mxu0 0.0
    %898 = vmatpush2.msra.mxu0 0.0
    %899 = vmatprep.subr.mxu0 0.0
    %900 = vmatpush2.msra.mxu0 0.0
    %901 = vmatprep.subr.mxu0 0.0
    %902 = vmatpush2.msra.mxu0 0.0
    %903 = vmatprep.subr.mxu0 0.0
    %904 = vmatpush2.msra.mxu0 0.0
    %905 = vmatprep.subr.mxu0 0.0
    %906 = vmatpush2.msra.mxu0 0.0
    %907 = vmatprep.subr.mxu0 0.0
    %908 = vmatpush2.msra.mxu0 0.0
    %909 = vmatprep.subr.mxu0 0.0
    %910 = vmatpush2.msra.mxu0 0.0
    %911 = vmatprep.subr.mxu0 0.0
    %912 = vmatpush2.msra.mxu0 0.0
    %913 = vmatprep.subr.mxu0 0.0
    %914 = vmatpush2.msra.mxu0 0.0
    %915 = vmatprep.subr.mxu0 0.0
    %916 = vmatpush2.msra.mxu0 0.0
    %917 = vmatprep.subr.mxu0 0.0
    %918 = vmatpush2.msra.mxu0 0.0
    %919 = vmatprep.subr.mxu0 0.0
    %920 = vmatpush2.msra.mxu0 0.0
    %921 = vmatprep.subr.mxu0 0.0
    %922 = vmatpush2.msra.mxu0 0.0
    %923 = vmatprep.subr.mxu0 0.0
    %924 = vmatpush2.msra.mxu0 0.0
    %925 = vmatprep.subr.mxu0 0.0
    %926 = vmatpush2.msra.mxu0 0.0
    %927 = vmatprep.subr.mxu0 0.0
    %928 = vmatpush2.msra.mxu0 0.0
    %929 = vmatprep.mubr.f32.mxu0 0.0
    %930 = vmatmul.mubr.f32.gmra.mxu0 %v857
    %v931 = vpop.f32.mrf.mxu0
    %v932 = vadd.f32 0.0, %v931
    %v933 = vpop.f32.mrf.mxu0
    %v934 = vadd.f32 0.0, %v933
    %935 = vdwg.mxu0
    %v936 = vsel %vm198, %v932, 0.0
    %v937 = vsel %vm198, %v934, 0.0
    %v938 = vadd.f32 %v936, %v937
    %939 = vadd.xlane.f32.xlu0 %v938
    %v940 = vpop.xlane.xlu0 %939
    %v941 = vmul.f32 %v940, %v485
    %v942 = vld [vmem:[%s4] sm:$0xf]
    %v943 = vmul.f32 %v941, %v942
    %v944 = vsel %vm489, %v943, 0.0
    %v945 = vrot.slane %v944, 4
    %v946 = vadd.f32 %v944, %v945
    %v947 = vrot.slane %v946, 2
    %v948 = vadd.f32 %v946, %v947
    %v949 = vrot.slane %v948, 1
    %v950 = vadd.f32 %v948, %v949
    %v951 = vld [vmem:[%s5] sm:$0x1]
    %v952 = vadd.f32 %v950, %v951
    %v953 = vmax.f32 %v952, 0.0
    %v954 = vld [vmem:[%s6] sm:$0xf]
    %v955 = vlaneseq
    %v956 = vshrl.u32 %v955, 7
    %v957 = vsub.s32 0, %v956
    %v958 = vrot.slane %v953, %v957
    %v959 = vmul.f32 %v954, %v958
    %v960 = vsel %vm489, %v959, 0.0
    %961 = vadd.xlane.f32.xlu0 %v960
    %v962 = vpop.xlane.xlu0 %961
    %v963 = vld [vmem:[%s7] sm:$0xf]
    %v964 = vadd.f32 %v962, %v963
    %v965 = vxor.u32 %v964, 2147483648
    %v966 = vmul.f32 %v965, 1.442695
    %v967 = vpow.pop %v966
    %v968 = vadd.f32 %v967, 1.0
    %v969 = vrcp.pop %v968
    %v970 = vmul.f32 1.0, %v969
    %972 = vset.pattern.permute.xlu0 0
    %973 = vperm.xlu0 %972, %v970
    %v974 = vpop.permute.xlu0 %973
    %v976 = vmul.f32 %v932, %v974
    %v977 = vmul.f32 %v934, %v974
    %v978 = vadd.f32 %v976, %v532
    %v979 = vadd.f32 %v977, %v534
    %v982 = vcombine.low %v978, %v979
    %s984 = scalar_lea.vmem [#allocation7], 8
    %985 = vst [vmem:[%s984] sm:$0xff] %v982
    // Predicated region
    $region38: #{tpu_custom_call.1} parent=1 // pred_check
      _
    $region39: #{tpu_custom_call.1} parent=1 // pred_check_branch
      %987 = sbr.rel (0) target = $region41
    $region40: #{tpu_custom_call.1} parent=1 // pred_region
      %s989 = ssub.s32 256, 256
      %990 = vsyncadd [#allocation6], %s989
      %s991 = sshll.u32 [#allocation7], 4
      %s992 = int_to_ptr.vmem [resolvable:$true] %s991
      %997 = dma.vmem_to_hbm [thread:$0]  %s992, 256, %s8, [#allocation6], 128, 128, 8
    $region41: #{tpu_custom_call.1} parent=1 // pred_fallthru
      _
    // Predicated region
    $region42: #{tpu_custom_call.1} parent=1 // pred_check
      _
    $region43: #{tpu_custom_call.1} parent=1 // pred_check_branch
      %999 = sbr.rel (0) target = $region45
    $region44: #{tpu_custom_call.1} parent=1 // pred_region
      %1000 = dma.done [#allocation6], 256
    $region45: #{tpu_custom_call.1} parent=1 // pred_fallthru
      _
    %1001 = vsyncpa [#allocation5], 1
    %1002 = vsyncpa [#allocation6], 1

</llo_original>
